<compile_context>
chip_gen: v7x
topology: tpu7x:2x2x1
jax: 0.10.0
libtpu: 0.0.40
codegen_flags: <defaults>
</compile_context>

<pallas_src>
import jax
import jax.numpy as jnp
from jax import lax
from jax.experimental import pallas as pl
from jax.experimental.pallas import tpu as pltpu


def _round_up(n, m):
    return ((n + m - 1) // m) * m


# ----------------------------------------------------------------------------
# In-kernel helpers
# ----------------------------------------------------------------------------
def _shifted_tap(a, dy, dx, H, W, pos, col):
    """Shifted copy of a (C, H*W) map: tap[c, p] = a[c, p + dy*W + dx].

    One pltpu.roll (XLU lane rotation) per tap + a validity mask.  `valid` is
    None when every position is in range (center tap).  Positions that roll
    circularly across the image boundary are exactly the out-of-range ones,
    so the mask also covers the wrap-around.
    """
    HW = a.shape[-1]
    s = dy * W + dx
    t = a if s == 0 else pltpu.roll(a, shift=(-s) % HW, axis=1)
    valid = None
    if dy > 0:
        valid = pos < (H - dy) * W          # source row y+dy < H
    elif dy < 0:
        valid = pos >= (-dy) * W            # source row y+dy >= 0
    if dx > 0:
        vc = col < (W - dx)                 # source col x+dx < W
        valid = vc if valid is None else valid & vc
    elif dx < 0:
        vc = col >= (-dx)                   # source col x+dx >= 0
        valid = vc if valid is None else valid & vc
    return t, valid


def _im2col(a, K, pad, H, W, pos, col):
    """(C, HW) -> (K*K*C, HW) zero-padded 'same' patches, tap-major (ky, kx)."""
    taps = []
    for ky in range(K):
        for kx in range(K):
            t, valid = _shifted_tap(a, ky - pad, kx - pad, H, W, pos, col)
            if valid is not None:
                t = jnp.where(valid, t, 0.0)
            taps.append(t)
    return jnp.concatenate(taps, axis=0) if len(taps) > 1 else taps[0]


def _maxpool3x3(a, H, W, pos, col):
    """3x3 / stride-1 / pad-1 max pool on (C, HW) as a running max."""
    pooled = a                              # center tap, always valid
    for dy in (-1, 0, 1):
        for dx in (-1, 0, 1):
            if dy == 0 and dx == 0:
                continue
            t, valid = _shifted_tap(a, dy, dx, H, W, pos, col)
            pooled = jnp.where(valid, jnp.maximum(pooled, t), pooled)
    return pooled


# ----------------------------------------------------------------------------
# Fused Inception kernel (one sample per grid step)
# ----------------------------------------------------------------------------
def _make_inception_kernel(*, H, W, c1, c1p, c2_0p, c2_1, c3_0p, c3_1, c4):
    HW = H * W
    o2 = c1                   # channel offsets of each branch in the output
    o3 = o2 + c2_1
    o4 = o3 + c3_1

    def kernel(x_ref, w111_ref, b111_ref, w22_ref, b22_ref,
               w32_ref, b32_ref, w4_ref, b4_ref, o_ref):
        x = x_ref[0].astype(jnp.float32)                       # (Cin, HW)
        pos = lax.broadcasted_iota(jnp.int32, (1, HW), 1)      # flat position
        col = pos % W                                          # column index

        # Branches 1/2/3 entry: ONE 1x1 matmul (Cout groups padded to sublane
        # multiples so the splits below are tile-aligned).  Bias + ReLU fused.
        y = jnp.dot(w111_ref[...], x, preferred_element_type=jnp.float32)
        y = jnp.maximum(y + b111_ref[...], 0.0)
        o_ref[0, 0:c1, :] = y[0:c1].astype(o_ref.dtype)        # p1 -> output
        p2_0 = y[c1p:c1p + c2_0p]                              # stays in VMEM
        p3_0 = y[c1p + c2_0p:c1p + c2_0p + c3_0p]              # stays in VMEM

        # Branch 2: 3x3 'same' conv as a single im2col matmul (contraction 9*c2_0p).
        p2 = jnp.dot(w22_ref[...], _im2col(p2_0, 3, 1, H, W, pos, col),
                     preferred_element_type=jnp.float32)
        o_ref[0, o2:o2 + c2_1, :] = jnp.maximum(p2 + b22_ref[...], 0.0).astype(o_ref.dtype)

        # Branch 3: 5x5 'same' conv as a single im2col matmul (contraction 25*c3_0p).
        p3 = jnp.dot(w32_ref[...], _im2col(p3_0, 5, 2, H, W, pos, col),
                     preferred_element_type=jnp.float32)
        o_ref[0, o3:o3 + c3_1, :] = jnp.maximum(p3 + b32_ref[...], 0.0).astype(o_ref.dtype)

        # Branch 4: 3x3 maxpool (running max) fused with the following 1x1 conv.
        pooled = _maxpool3x3(x, H, W, pos, col)
        p4 = jnp.dot(w4_ref[...], pooled, preferred_element_type=jnp.float32)
        o_ref[0, o4:o4 + c4, :] = jnp.maximum(p4 + b4_ref[...], 0.0).astype(o_ref.dtype)

    return kernel


# ----------------------------------------------------------------------------
# One-time weight preparation (hoisted out of the jitted forward)
# ----------------------------------------------------------------------------
def prepare_inception_params(params, sublane=8):
    w11, b11 = params["p1_1"]
    w21, b21 = params["p2_1"]
    w22, b22 = params["p2_2"]
    w31, b31 = params["p3_1"]
    w32, b32 = params["p3_2"]
    w42, b42 = params["p4_2"]

    Cin = w11.shape[2]
    c1, c2_0, c2_1 = w11.shape[3], w21.shape[3], w22.shape[3]
    c3_0, c3_1 = w31.shape[3], w32.shape[3]
    c4 = w42.shape[3]
    c1p, c2_0p, c3_0p = (_round_up(c, sublane) for c in (c1, c2_0, c3_0))

    def conv1x1_group(w_hwio, b, rows_p):
        cout = w_hwio.shape[3]
        wm = jnp.transpose(w_hwio.reshape(Cin, cout), (1, 0))   # (Cout, Cin)
        return (jnp.pad(wm, ((0, rows_p - cout), (0, 0))),
                jnp.pad(b, (0, rows_p - cout)))

    w1m, b1p = conv1x1_group(w11, b11, c1p)
    w2m, b2p = conv1x1_group(w21, b21, c2_0p)
    w3m, b3p = conv1x1_group(w31, b31, c3_0p)
    w111 = jnp.concatenate([w1m, w2m, w3m], axis=0)             # (c1p+c2_0p+c3_0p, Cin)
    b111 = jnp.concatenate([b1p, b2p, b3p])[:, None]

    def im2col_weight(w_hwio, cin_p):
        # (K, K, Cin, Cout) -> (Cout, K*K*cin_p), tap-major (ky, kx), ci fastest,
        # with the Cin dim zero-padded to match the padded activation channels.
        K, _, cin, cout = w_hwio.shape
        w = jnp.pad(w_hwio, ((0, 0), (0, 0), (0, cin_p - cin), (0, 0)))
        return jnp.transpose(w, (3, 0, 1, 2)).reshape(cout, K * K * cin_p)

    w4m = jnp.transpose(w42.reshape(Cin, c4), (1, 0))           # (c4, Cin)

    weights = (w111, b111,
               im2col_weight(w22, c2_0p), b22[:, None],
               im2col_weight(w32, c3_0p), b32[:, None],
               w4m, b42[:, None])
    dims = dict(c1=c1, c1p=c1p, c2_0p=c2_0p, c2_1=c2_1,
                c3_0p=c3_0p, c3_1=c3_1, c4=c4)
    return weights, dims


def make_inception_forward(params, sublane=8):
    """Returns a jitted forward(x_nchw); matmul-form weights are prepared once."""
    weights, dims = prepare_inception_params(params, sublane)
    ctot = dims["c1"] + dims["c2_1"] + dims["c3_1"] + dims["c4"]

    @jax.jit
    def forward(x_nchw):
        N, Cin, H, W = x_nchw.shape
        HW = H * W
        x = x_nchw.reshape(N, Cin, HW)          # NCHW -> (N, C, H*W): free reshape
        kernel = _make_inception_kernel(H=H, W=W, **dims)
        # NOTE: at production GoogLeNet shapes add a spatial "parallel" grid
        # axis (128-lane multiples + pad*W halo), an explicit vmem_limit_bytes,
        # and cast matmul operands to bf16 (keep f32 accumulation).
        out = pl.pallas_call(
            kernel,
            out_shape=jax.ShapeDtypeStruct((N, ctot, HW), x_nchw.dtype),
            grid=(N,),
            in_specs=[pl.BlockSpec((1, Cin, HW), lambda n: (n, 0, 0))]
                     + [pl.BlockSpec(w.shape, lambda n: (0, 0)) for w in weights],
            out_specs=pl.BlockSpec((1, ctot, HW), lambda n: (n, 0, 0)),
            compiler_params=pltpu.CompilerParams(
                dimension_semantics=("parallel",)),
        )(x, *weights)
        return out.reshape(N, ctot, H, W)       # free reshape back to NCHW

    return forward


# ----------------------------------------------------------------------------
# Parameters
# ----------------------------------------------------------------------------
def init_inception_params(key, in_channels, c1, c2, c3, c4):
    """Deterministic parameter init.  Weights stored HWIO: (K, K, Cin, Cout)."""
    def conv_init(key, K, cin, cout):
        kw, kb = jax.random.split(key)
        fan_in = cin * K * K
        bound = 1.0 / jnp.sqrt(fan_in)
        w = jax.random.uniform(kw, (K, K, cin, cout), jnp.float32, -bound, bound)
        b = jax.random.uniform(kb, (cout,), jnp.float32, -bound, bound)
        return w, b

    keys = jax.random.split(key, 6)
    return {
        "p1_1": conv_init(keys[0], 1, in_channels, c1),
        "p2_1": conv_init(keys[1], 1, in_channels, c2[0]),
        "p2_2": conv_init(keys[2], 3, c2[0], c2[1]),
        "p3_1": conv_init(keys[3], 1, in_channels, c3[0]),
        "p3_2": conv_init(keys[4], 5, c3[0], c3[1]),
        "p4_2": conv_init(keys[5], 1, in_channels, c4),
    }


# ----------------------------------------------------------------------------
# Pure-JAX reference (self-check only)
# ----------------------------------------------------------------------------
def _ref_conv_relu(x, w, b, pad):
    y = lax.conv_general_dilated(
        x, w, window_strides=(1, 1), padding=((pad, pad), (pad, pad)),
        dimension_numbers=("NHWC", "HWIO", "NHWC"))
    return jnp.maximum(y + b, 0.0)


def _ref_forward(x_nchw, params):
    x = jnp.transpose(x_nchw, (0, 2, 3, 1))
    p1 = _ref_conv_relu(x, *params["p1_1"], pad=0)
    p2 = _ref_conv_relu(_ref_conv_relu(x, *params["p2_1"], pad=0), *params["p2_2"], pad=1)
    p3 = _ref_conv_relu(_ref_conv_relu(x, *params["p3_1"], pad=0), *params["p3_2"], pad=2)
    p4 = lax.reduce_window(x, -jnp.inf, lax.max, (1, 3, 3, 1), (1, 1, 1, 1),
                           padding=((0, 0), (1, 1), (1, 1), (0, 0)))
    p4 = _ref_conv_relu(p4, *params["p4_2"], pad=0)
    out = jnp.concatenate([p1, p2, p3, p4], axis=-1)
    return jnp.transpose(out, (0, 3, 1, 2))


# ----------------------------------------------------------------------------
# Main
# ----------------------------------------------------------------------------
if __name__ == "__main__":
    key = jax.random.PRNGKey(0)
    k_x, k_p = jax.random.split(key)

    # Small shapes: batch=2, in_channels=4, spatial 16x16.
    N, C, H, W = 2, 4, 16, 16
    c1, c2, c3, c4 = 4, (4, 8), (4, 8), 4   # output channels = 4+8+8+4 = 24

    x = jax.random.normal(k_x, (N, C, H, W), jnp.float32)
    params = init_inception_params(k_p, C, c1, c2, c3, c4)

    forward = make_inception_forward(params)
    out = jax.block_until_ready(forward(x))
    assert out.shape == (N, c1 + c2[1] + c3[1] + c4, H, W), out.shape

    ref = jax.block_until_ready(_ref_forward(x, params))
    max_err = float(jnp.max(jnp.abs(out - ref)))
    assert jnp.allclose(out, ref, rtol=1e-4, atol=1e-5), max_err

    print("KERNEL_OK")
</pallas_src>

<mosaic_0001>
module attributes {stable_mosaic.version = 11 : i64} {
  func.func @kernel(%arg0: i32, %arg1: memref<1x4x256xf32, #tpu.memory_space<vmem>>, %arg2: memref<24x4xf32, #tpu.memory_space<vmem>>, %arg3: memref<24x1xf32, #tpu.memory_space<vmem>>, %arg4: memref<8x72xf32, #tpu.memory_space<vmem>>, %arg5: memref<8x1xf32, #tpu.memory_space<vmem>>, %arg6: memref<8x200xf32, #tpu.memory_space<vmem>>, %arg7: memref<8x1xf32, #tpu.memory_space<vmem>>, %arg8: memref<4x4xf32, #tpu.memory_space<vmem>>, %arg9: memref<4x1xf32, #tpu.memory_space<vmem>>, %arg10: memref<1x24x256xf32, #tpu.memory_space<vmem>>) attributes {dimension_semantics = [#tpu.dimension_semantics<parallel>], iteration_bounds = array<i64: 2>, scalar_prefetch = 0 : i64, scratch_operands = 0 : i64, tpu.core_type = #tpu.core_type<tc>, window_params = [{transform_indices = @transform_0, window_bounds = array<i64: 1, 4, 256>}, {pipeline_mode = #tpu.pipeline_mode<synchronous>, transform_indices = @transform_1, window_bounds = array<i64: 24, 4>}, {pipeline_mode = #tpu.pipeline_mode<synchronous>, transform_indices = @transform_2, window_bounds = array<i64: 24, 1>}, {pipeline_mode = #tpu.pipeline_mode<synchronous>, transform_indices = @transform_3, window_bounds = array<i64: 8, 72>}, {pipeline_mode = #tpu.pipeline_mode<synchronous>, transform_indices = @transform_4, window_bounds = array<i64: 8, 1>}, {pipeline_mode = #tpu.pipeline_mode<synchronous>, transform_indices = @transform_5, window_bounds = array<i64: 8, 200>}, {pipeline_mode = #tpu.pipeline_mode<synchronous>, transform_indices = @transform_6, window_bounds = array<i64: 8, 1>}, {pipeline_mode = #tpu.pipeline_mode<synchronous>, transform_indices = @transform_7, window_bounds = array<i64: 4, 4>}, {pipeline_mode = #tpu.pipeline_mode<synchronous>, transform_indices = @transform_8, window_bounds = array<i64: 4, 1>}, {transform_indices = @transform_9, window_bounds = array<i64: 1, 24, 256>}]} {
    %c0 = arith.constant 0 : index
    %c0_0 = arith.constant 0 : index
    %c0_1 = arith.constant 0 : index
    %0 = vector.load %arg1[%c0, %c0_0, %c0_1] : memref<1x4x256xf32, #tpu.memory_space<vmem>>, vector<1x4x256xf32>
    %1 = vector.shape_cast %0 : vector<1x4x256xf32> to vector<4x256xf32>
    %2 = tpu.iota {dimensions = array<i32: 1>} : vector<1x256xi32>
    %c16_i32 = arith.constant 16 : i32
    %c0_i32 = arith.constant 0 : i32
    %3 = arith.cmpi eq, %c16_i32, %c0_i32 : i32
    %c1_i32 = arith.constant 1 : i32
    %4 = arith.select %3, %c1_i32, %c16_i32 : i32
    %5 = vector.broadcast %4 : i32 to vector<1x256xi32>
    %6 = arith.remsi %2, %5 : vector<1x256xi32>
    %c0_i32_2 = arith.constant 0 : i32
    %7 = vector.broadcast %c0_i32_2 : i32 to vector<1x256xi32>
    %8 = arith.cmpi ne, %6, %7 : vector<1x256xi32>
    %c0_i32_3 = arith.constant 0 : i32
    %9 = vector.broadcast %c0_i32_3 : i32 to vector<1x256xi32>
    %10 = arith.cmpi slt, %6, %9 : vector<1x256xi32>
    %c0_i32_4 = arith.constant 0 : i32
    %11 = arith.cmpi slt, %4, %c0_i32_4 : i32
    %12 = vector.broadcast %11 : i1 to vector<1x256xi1>
    %13 = vector.broadcast %12 : vector<1x256xi1> to vector<1x256xi1>
    %14 = arith.xori %10, %13 : vector<1x256xi1>
    %15 = arith.andi %14, %8 : vector<1x256xi1>
    %16 = vector.broadcast %4 : i32 to vector<1x256xi32>
    %17 = arith.addi %6, %16 : vector<1x256xi32>
    %18 = arith.select %15, %17, %6 : vector<1x256xi1>, vector<1x256xi32>
    %c0_5 = arith.constant 0 : index
    %c0_6 = arith.constant 0 : index
    %19 = vector.load %arg2[%c0_5, %c0_6] : memref<24x4xf32, #tpu.memory_space<vmem>>, vector<24x4xf32>
    %cst = arith.constant dense<0.000000e+00> : vector<24x256xf32>
    %20 = tpu.matmul %19, %1, %cst {dimension_numbers = #tpu.dot_dimension_numbers<[1], [0], [0], [1], [0, 0, 1, 1], [], []>} : vector<24x4xf32>, vector<4x256xf32>, vector<24x256xf32> -> vector<24x256xf32>
    %c0_7 = arith.constant 0 : index
    %c0_8 = arith.constant 0 : index
    %21 = vector.load %arg3[%c0_7, %c0_8] : memref<24x1xf32, #tpu.memory_space<vmem>>, vector<24x1xf32>
    %22 = vector.broadcast %21 : vector<24x1xf32> to vector<24x256xf32>
    %23 = arith.addf %20, %22 : vector<24x256xf32>
    %cst_9 = arith.constant 0.000000e+00 : f32
    %24 = vector.broadcast %cst_9 : f32 to vector<24x256xf32>
    %25 = arith.maximumf %23, %24 : vector<24x256xf32>
    %26 = vector.extract_strided_slice %25 {offsets = [0, 0], sizes = [4, 256], strides = [1, 1]} : vector<24x256xf32> to vector<4x256xf32>
    %c0_10 = arith.constant 0 : index
    %c0_11 = arith.constant 0 : index
    %c0_12 = arith.constant 0 : index
    %27 = vector.load %arg10[%c0_10, %c0_11, %c0_12] : memref<1x24x256xf32, #tpu.memory_space<vmem>>, vector<1x4x256xf32>
    %28 = vector.shape_cast %27 : vector<1x4x256xf32> to vector<4x256xf32>
    %29 = vector.shape_cast %26 : vector<4x256xf32> to vector<1x4x256xf32>
    tpu.vector_store %arg10[%c0_10, %c0_11, %c0_12], %29 {strides = array<i32>} : memref<1x24x256xf32, #tpu.memory_space<vmem>>, vector<1x4x256xf32>,
    %30 = vector.extract_strided_slice %25 {offsets = [8, 0], sizes = [8, 256], strides = [1, 1]} : vector<24x256xf32> to vector<8x256xf32>
    %31 = vector.extract_strided_slice %25 {offsets = [16, 0], sizes = [8, 256], strides = [1, 1]} : vector<24x256xf32> to vector<8x256xf32>
    %c0_13 = arith.constant 0 : index
    %c0_14 = arith.constant 0 : index
    %32 = vector.load %arg4[%c0_13, %c0_14] : memref<8x72xf32, #tpu.memory_space<vmem>>, vector<8x72xf32>
    %c17_i32 = arith.constant 17 : i32
    %33 = tpu.dynamic_rotate %30 by %c17_i32 dim 1 : vector<8x256xf32>, i32 -> vector<8x256xf32>
    %c16_i32_15 = arith.constant 16 : i32
    %34 = vector.broadcast %c16_i32_15 : i32 to vector<1x256xi32>
    %35 = arith.cmpi sge, %2, %34 : vector<1x256xi32>
    %c1_i32_16 = arith.constant 1 : i32
    %36 = vector.broadcast %c1_i32_16 : i32 to vector<1x256xi32>
    %37 = arith.cmpi sge, %18, %36 : vector<1x256xi32>
    %38 = arith.andi %35, %37 : vector<1x256xi1>
    %cst_17 = arith.constant 0.000000e+00 : f32
    %39 = vector.shape_cast %38 : vector<1x256xi1> to vector<1x256xi1>
    %40 = vector.broadcast %39 : vector<1x256xi1> to vector<8x256xi1>
    %41 = vector.broadcast %cst_17 : f32 to vector<8x256xf32>
    %42 = arith.select %40, %33, %41 : vector<8x256xi1>, vector<8x256xf32>
    %c16_i32_18 = arith.constant 16 : i32
    %43 = tpu.dynamic_rotate %30 by %c16_i32_18 dim 1 : vector<8x256xf32>, i32 -> vector<8x256xf32>
    %c16_i32_19 = arith.constant 16 : i32
    %44 = vector.broadcast %c16_i32_19 : i32 to vector<1x256xi32>
    %45 = arith.cmpi sge, %2, %44 : vector<1x256xi32>
    %cst_20 = arith.constant 0.000000e+00 : f32
    %46 = vector.shape_cast %45 : vector<1x256xi1> to vector<1x256xi1>
    %47 = vector.broadcast %46 : vector<1x256xi1> to vector<8x256xi1>
    %48 = vector.broadcast %cst_20 : f32 to vector<8x256xf32>
    %49 = arith.select %47, %43, %48 : vector<8x256xi1>, vector<8x256xf32>
    %c15_i32 = arith.constant 15 : i32
    %50 = tpu.dynamic_rotate %30 by %c15_i32 dim 1 : vector<8x256xf32>, i32 -> vector<8x256xf32>
    %c16_i32_21 = arith.constant 16 : i32
    %51 = vector.broadcast %c16_i32_21 : i32 to vector<1x256xi32>
    %52 = arith.cmpi sge, %2, %51 : vector<1x256xi32>
    %c15_i32_22 = arith.constant 15 : i32
    %53 = vector.broadcast %c15_i32_22 : i32 to vector<1x256xi32>
    %54 = arith.cmpi slt, %18, %53 : vector<1x256xi32>
    %55 = arith.andi %52, %54 : vector<1x256xi1>
    %cst_23 = arith.constant 0.000000e+00 : f32
    %56 = vector.shape_cast %55 : vector<1x256xi1> to vector<1x256xi1>
    %57 = vector.broadcast %56 : vector<1x256xi1> to vector<8x256xi1>
    %58 = vector.broadcast %cst_23 : f32 to vector<8x256xf32>
    %59 = arith.select %57, %50, %58 : vector<8x256xi1>, vector<8x256xf32>
    %c1_i32_24 = arith.constant 1 : i32
    %60 = tpu.dynamic_rotate %30 by %c1_i32_24 dim 1 : vector<8x256xf32>, i32 -> vector<8x256xf32>
    %c1_i32_25 = arith.constant 1 : i32
    %61 = vector.broadcast %c1_i32_25 : i32 to vector<1x256xi32>
    %62 = arith.cmpi sge, %18, %61 : vector<1x256xi32>
    %cst_26 = arith.constant 0.000000e+00 : f32
    %63 = vector.shape_cast %62 : vector<1x256xi1> to vector<1x256xi1>
    %64 = vector.broadcast %63 : vector<1x256xi1> to vector<8x256xi1>
    %65 = vector.broadcast %cst_26 : f32 to vector<8x256xf32>
    %66 = arith.select %64, %60, %65 : vector<8x256xi1>, vector<8x256xf32>
    %c255_i32 = arith.constant 255 : i32
    %67 = tpu.dynamic_rotate %30 by %c255_i32 dim 1 : vector<8x256xf32>, i32 -> vector<8x256xf32>
    %c15_i32_27 = arith.constant 15 : i32
    %68 = vector.broadcast %c15_i32_27 : i32 to vector<1x256xi32>
    %69 = arith.cmpi slt, %18, %68 : vector<1x256xi32>
    %cst_28 = arith.constant 0.000000e+00 : f32
    %70 = vector.shape_cast %69 : vector<1x256xi1> to vector<1x256xi1>
    %71 = vector.broadcast %70 : vector<1x256xi1> to vector<8x256xi1>
    %72 = vector.broadcast %cst_28 : f32 to vector<8x256xf32>
    %73 = arith.select %71, %67, %72 : vector<8x256xi1>, vector<8x256xf32>
    %c241_i32 = arith.constant 241 : i32
    %74 = tpu.dynamic_rotate %30 by %c241_i32 dim 1 : vector<8x256xf32>, i32 -> vector<8x256xf32>
    %c240_i32 = arith.constant 240 : i32
    %75 = vector.broadcast %c240_i32 : i32 to vector<1x256xi32>
    %76 = arith.cmpi slt, %2, %75 : vector<1x256xi32>
    %c1_i32_29 = arith.constant 1 : i32
    %77 = vector.broadcast %c1_i32_29 : i32 to vector<1x256xi32>
    %78 = arith.cmpi sge, %18, %77 : vector<1x256xi32>
    %79 = arith.andi %76, %78 : vector<1x256xi1>
    %cst_30 = arith.constant 0.000000e+00 : f32
    %80 = vector.shape_cast %79 : vector<1x256xi1> to vector<1x256xi1>
    %81 = vector.broadcast %80 : vector<1x256xi1> to vector<8x256xi1>
    %82 = vector.broadcast %cst_30 : f32 to vector<8x256xf32>
    %83 = arith.select %81, %74, %82 : vector<8x256xi1>, vector<8x256xf32>
    %c240_i32_31 = arith.constant 240 : i32
    %84 = tpu.dynamic_rotate %30 by %c240_i32_31 dim 1 : vector<8x256xf32>, i32 -> vector<8x256xf32>
    %c240_i32_32 = arith.constant 240 : i32
    %85 = vector.broadcast %c240_i32_32 : i32 to vector<1x256xi32>
    %86 = arith.cmpi slt, %2, %85 : vector<1x256xi32>
    %cst_33 = arith.constant 0.000000e+00 : f32
    %87 = vector.shape_cast %86 : vector<1x256xi1> to vector<1x256xi1>
    %88 = vector.broadcast %87 : vector<1x256xi1> to vector<8x256xi1>
    %89 = vector.broadcast %cst_33 : f32 to vector<8x256xf32>
    %90 = arith.select %88, %84, %89 : vector<8x256xi1>, vector<8x256xf32>
    %c239_i32 = arith.constant 239 : i32
    %91 = tpu.dynamic_rotate %30 by %c239_i32 dim 1 : vector<8x256xf32>, i32 -> vector<8x256xf32>
    %c240_i32_34 = arith.constant 240 : i32
    %92 = vector.broadcast %c240_i32_34 : i32 to vector<1x256xi32>
    %93 = arith.cmpi slt, %2, %92 : vector<1x256xi32>
    %c15_i32_35 = arith.constant 15 : i32
    %94 = vector.broadcast %c15_i32_35 : i32 to vector<1x256xi32>
    %95 = arith.cmpi slt, %18, %94 : vector<1x256xi32>
    %96 = arith.andi %93, %95 : vector<1x256xi1>
    %cst_36 = arith.constant 0.000000e+00 : f32
    %97 = vector.shape_cast %96 : vector<1x256xi1> to vector<1x256xi1>
    %98 = vector.broadcast %97 : vector<1x256xi1> to vector<8x256xi1>
    %99 = vector.broadcast %cst_36 : f32 to vector<8x256xf32>
    %100 = arith.select %98, %91, %99 : vector<8x256xi1>, vector<8x256xf32>
    %101 = tpu.concatenate %42, %49, %59, %66, %30, %73, %83, %90, %100 in 0 : vector<8x256xf32>, vector<8x256xf32>, vector<8x256xf32>, vector<8x256xf32>, vector<8x256xf32>, vector<8x256xf32>, vector<8x256xf32>, vector<8x256xf32>, vector<8x256xf32> -> vector<72x256xf32>
    %cst_37 = arith.constant dense<0.000000e+00> : vector<8x256xf32>
    %102 = tpu.matmul %32, %101, %cst_37 {dimension_numbers = #tpu.dot_dimension_numbers<[1], [0], [0], [1], [0, 0, 1, 1], [], []>} : vector<8x72xf32>, vector<72x256xf32>, vector<8x256xf32> -> vector<8x256xf32>
    %c0_38 = arith.constant 0 : index
    %c0_39 = arith.constant 0 : index
    %103 = vector.load %arg5[%c0_38, %c0_39] : memref<8x1xf32, #tpu.memory_space<vmem>>, vector<8x1xf32>
    %104 = vector.broadcast %103 : vector<8x1xf32> to vector<8x256xf32>
    %105 = arith.addf %102, %104 : vector<8x256xf32>
    %cst_40 = arith.constant 0.000000e+00 : f32
    %106 = vector.broadcast %cst_40 : f32 to vector<8x256xf32>
    %107 = arith.maximumf %105, %106 : vector<8x256xf32>
    %c0_41 = arith.constant 0 : index
    %c4 = arith.constant 4 : index
    %c0_42 = arith.constant 0 : index
    %108 = vector.load %arg10[%c0_41, %c4, %c0_42] : memref<1x24x256xf32, #tpu.memory_space<vmem>>, vector<1x8x256xf32>
    %109 = vector.shape_cast %108 : vector<1x8x256xf32> to vector<8x256xf32>
    %110 = vector.shape_cast %107 : vector<8x256xf32> to vector<1x8x256xf32>
    tpu.vector_store %arg10[%c0_41, %c4, %c0_42], %110 {strides = array<i32>} : memref<1x24x256xf32, #tpu.memory_space<vmem>>, vector<1x8x256xf32>,
    %c0_43 = arith.constant 0 : index
    %c0_44 = arith.constant 0 : index
    %111 = vector.load %arg6[%c0_43, %c0_44] : memref<8x200xf32, #tpu.memory_space<vmem>>, vector<8x200xf32>
    %c34_i32 = arith.constant 34 : i32
    %112 = tpu.dynamic_rotate %31 by %c34_i32 dim 1 : vector<8x256xf32>, i32 -> vector<8x256xf32>
    %c32_i32 = arith.constant 32 : i32
    %113 = vector.broadcast %c32_i32 : i32 to vector<1x256xi32>
    %114 = arith.cmpi sge, %2, %113 : vector<1x256xi32>
    %c2_i32 = arith.constant 2 : i32
    %115 = vector.broadcast %c2_i32 : i32 to vector<1x256xi32>
    %116 = arith.cmpi sge, %18, %115 : vector<1x256xi32>
    %117 = arith.andi %114, %116 : vector<1x256xi1>
    %cst_45 = arith.constant 0.000000e+00 : f32
    %118 = vector.shape_cast %117 : vector<1x256xi1> to vector<1x256xi1>
    %119 = vector.broadcast %118 : vector<1x256xi1> to vector<8x256xi1>
    %120 = vector.broadcast %cst_45 : f32 to vector<8x256xf32>
    %121 = arith.select %119, %112, %120 : vector<8x256xi1>, vector<8x256xf32>
    %c33_i32 = arith.constant 33 : i32
    %122 = tpu.dynamic_rotate %31 by %c33_i32 dim 1 : vector<8x256xf32>, i32 -> vector<8x256xf32>
    %c32_i32_46 = arith.constant 32 : i32
    %123 = vector.broadcast %c32_i32_46 : i32 to vector<1x256xi32>
    %124 = arith.cmpi sge, %2, %123 : vector<1x256xi32>
    %c1_i32_47 = arith.constant 1 : i32
    %125 = vector.broadcast %c1_i32_47 : i32 to vector<1x256xi32>
    %126 = arith.cmpi sge, %18, %125 : vector<1x256xi32>
    %127 = arith.andi %124, %126 : vector<1x256xi1>
    %cst_48 = arith.constant 0.000000e+00 : f32
    %128 = vector.shape_cast %127 : vector<1x256xi1> to vector<1x256xi1>
    %129 = vector.broadcast %128 : vector<1x256xi1> to vector<8x256xi1>
    %130 = vector.broadcast %cst_48 : f32 to vector<8x256xf32>
    %131 = arith.select %129, %122, %130 : vector<8x256xi1>, vector<8x256xf32>
    %c32_i32_49 = arith.constant 32 : i32
    %132 = tpu.dynamic_rotate %31 by %c32_i32_49 dim 1 : vector<8x256xf32>, i32 -> vector<8x256xf32>
    %c32_i32_50 = arith.constant 32 : i32
    %133 = vector.broadcast %c32_i32_50 : i32 to vector<1x256xi32>
    %134 = arith.cmpi sge, %2, %133 : vector<1x256xi32>
    %cst_51 = arith.constant 0.000000e+00 : f32
    %135 = vector.shape_cast %134 : vector<1x256xi1> to vector<1x256xi1>
    %136 = vector.broadcast %135 : vector<1x256xi1> to vector<8x256xi1>
    %137 = vector.broadcast %cst_51 : f32 to vector<8x256xf32>
    %138 = arith.select %136, %132, %137 : vector<8x256xi1>, vector<8x256xf32>
    %c31_i32 = arith.constant 31 : i32
    %139 = tpu.dynamic_rotate %31 by %c31_i32 dim 1 : vector<8x256xf32>, i32 -> vector<8x256xf32>
    %c32_i32_52 = arith.constant 32 : i32
    %140 = vector.broadcast %c32_i32_52 : i32 to vector<1x256xi32>
    %141 = arith.cmpi sge, %2, %140 : vector<1x256xi32>
    %c15_i32_53 = arith.constant 15 : i32
    %142 = vector.broadcast %c15_i32_53 : i32 to vector<1x256xi32>
    %143 = arith.cmpi slt, %18, %142 : vector<1x256xi32>
    %144 = arith.andi %141, %143 : vector<1x256xi1>
    %cst_54 = arith.constant 0.000000e+00 : f32
    %145 = vector.shape_cast %144 : vector<1x256xi1> to vector<1x256xi1>
    %146 = vector.broadcast %145 : vector<1x256xi1> to vector<8x256xi1>
    %147 = vector.broadcast %cst_54 : f32 to vector<8x256xf32>
    %148 = arith.select %146, %139, %147 : vector<8x256xi1>, vector<8x256xf32>
    %c30_i32 = arith.constant 30 : i32
    %149 = tpu.dynamic_rotate %31 by %c30_i32 dim 1 : vector<8x256xf32>, i32 -> vector<8x256xf32>
    %c32_i32_55 = arith.constant 32 : i32
    %150 = vector.broadcast %c32_i32_55 : i32 to vector<1x256xi32>
    %151 = arith.cmpi sge, %2, %150 : vector<1x256xi32>
    %c14_i32 = arith.constant 14 : i32
    %152 = vector.broadcast %c14_i32 : i32 to vector<1x256xi32>
    %153 = arith.cmpi slt, %18, %152 : vector<1x256xi32>
    %154 = arith.andi %151, %153 : vector<1x256xi1>
    %cst_56 = arith.constant 0.000000e+00 : f32
    %155 = vector.shape_cast %154 : vector<1x256xi1> to vector<1x256xi1>
    %156 = vector.broadcast %155 : vector<1x256xi1> to vector<8x256xi1>
    %157 = vector.broadcast %cst_56 : f32 to vector<8x256xf32>
    %158 = arith.select %156, %149, %157 : vector<8x256xi1>, vector<8x256xf32>
    %c18_i32 = arith.constant 18 : i32
    %159 = tpu.dynamic_rotate %31 by %c18_i32 dim 1 : vector<8x256xf32>, i32 -> vector<8x256xf32>
    %c16_i32_57 = arith.constant 16 : i32
    %160 = vector.broadcast %c16_i32_57 : i32 to vector<1x256xi32>
    %161 = arith.cmpi sge, %2, %160 : vector<1x256xi32>
    %c2_i32_58 = arith.constant 2 : i32
    %162 = vector.broadcast %c2_i32_58 : i32 to vector<1x256xi32>
    %163 = arith.cmpi sge, %18, %162 : vector<1x256xi32>
    %164 = arith.andi %161, %163 : vector<1x256xi1>
    %cst_59 = arith.constant 0.000000e+00 : f32
    %165 = vector.shape_cast %164 : vector<1x256xi1> to vector<1x256xi1>
    %166 = vector.broadcast %165 : vector<1x256xi1> to vector<8x256xi1>
    %167 = vector.broadcast %cst_59 : f32 to vector<8x256xf32>
    %168 = arith.select %166, %159, %167 : vector<8x256xi1>, vector<8x256xf32>
    %c17_i32_60 = arith.constant 17 : i32
    %169 = tpu.dynamic_rotate %31 by %c17_i32_60 dim 1 : vector<8x256xf32>, i32 -> vector<8x256xf32>
    %c16_i32_61 = arith.constant 16 : i32
    %170 = vector.broadcast %c16_i32_61 : i32 to vector<1x256xi32>
    %171 = arith.cmpi sge, %2, %170 : vector<1x256xi32>
    %c1_i32_62 = arith.constant 1 : i32
    %172 = vector.broadcast %c1_i32_62 : i32 to vector<1x256xi32>
    %173 = arith.cmpi sge, %18, %172 : vector<1x256xi32>
    %174 = arith.andi %171, %173 : vector<1x256xi1>
    %cst_63 = arith.constant 0.000000e+00 : f32
    %175 = vector.shape_cast %174 : vector<1x256xi1> to vector<1x256xi1>
    %176 = vector.broadcast %175 : vector<1x256xi1> to vector<8x256xi1>
    %177 = vector.broadcast %cst_63 : f32 to vector<8x256xf32>
    %178 = arith.select %176, %169, %177 : vector<8x256xi1>, vector<8x256xf32>
    %c16_i32_64 = arith.constant 16 : i32
    %179 = tpu.dynamic_rotate %31 by %c16_i32_64 dim 1 : vector<8x256xf32>, i32 -> vector<8x256xf32>
    %c16_i32_65 = arith.constant 16 : i32
    %180 = vector.broadcast %c16_i32_65 : i32 to vector<1x256xi32>
    %181 = arith.cmpi sge, %2, %180 : vector<1x256xi32>
    %cst_66 = arith.constant 0.000000e+00 : f32
    %182 = vector.shape_cast %181 : vector<1x256xi1> to vector<1x256xi1>
    %183 = vector.broadcast %182 : vector<1x256xi1> to vector<8x256xi1>
    %184 = vector.broadcast %cst_66 : f32 to vector<8x256xf32>
    %185 = arith.select %183, %179, %184 : vector<8x256xi1>, vector<8x256xf32>
    %c15_i32_67 = arith.constant 15 : i32
    %186 = tpu.dynamic_rotate %31 by %c15_i32_67 dim 1 : vector<8x256xf32>, i32 -> vector<8x256xf32>
    %c16_i32_68 = arith.constant 16 : i32
    %187 = vector.broadcast %c16_i32_68 : i32 to vector<1x256xi32>
    %188 = arith.cmpi sge, %2, %187 : vector<1x256xi32>
    %c15_i32_69 = arith.constant 15 : i32
    %189 = vector.broadcast %c15_i32_69 : i32 to vector<1x256xi32>
    %190 = arith.cmpi slt, %18, %189 : vector<1x256xi32>
    %191 = arith.andi %188, %190 : vector<1x256xi1>
    %cst_70 = arith.constant 0.000000e+00 : f32
    %192 = vector.shape_cast %191 : vector<1x256xi1> to vector<1x256xi1>
    %193 = vector.broadcast %192 : vector<1x256xi1> to vector<8x256xi1>
    %194 = vector.broadcast %cst_70 : f32 to vector<8x256xf32>
    %195 = arith.select %193, %186, %194 : vector<8x256xi1>, vector<8x256xf32>
    %c14_i32_71 = arith.constant 14 : i32
    %196 = tpu.dynamic_rotate %31 by %c14_i32_71 dim 1 : vector<8x256xf32>, i32 -> vector<8x256xf32>
    %c16_i32_72 = arith.constant 16 : i32
    %197 = vector.broadcast %c16_i32_72 : i32 to vector<1x256xi32>
    %198 = arith.cmpi sge, %2, %197 : vector<1x256xi32>
    %c14_i32_73 = arith.constant 14 : i32
    %199 = vector.broadcast %c14_i32_73 : i32 to vector<1x256xi32>
    %200 = arith.cmpi slt, %18, %199 : vector<1x256xi32>
    %201 = arith.andi %198, %200 : vector<1x256xi1>
    %cst_74 = arith.constant 0.000000e+00 : f32
    %202 = vector.shape_cast %201 : vector<1x256xi1> to vector<1x256xi1>
    %203 = vector.broadcast %202 : vector<1x256xi1> to vector<8x256xi1>
    %204 = vector.broadcast %cst_74 : f32 to vector<8x256xf32>
    %205 = arith.select %203, %196, %204 : vector<8x256xi1>, vector<8x256xf32>
    %c2_i32_75 = arith.constant 2 : i32
    %206 = tpu.dynamic_rotate %31 by %c2_i32_75 dim 1 : vector<8x256xf32>, i32 -> vector<8x256xf32>
    %c2_i32_76 = arith.constant 2 : i32
    %207 = vector.broadcast %c2_i32_76 : i32 to vector<1x256xi32>
    %208 = arith.cmpi sge, %18, %207 : vector<1x256xi32>
    %cst_77 = arith.constant 0.000000e+00 : f32
    %209 = vector.shape_cast %208 : vector<1x256xi1> to vector<1x256xi1>
    %210 = vector.broadcast %209 : vector<1x256xi1> to vector<8x256xi1>
    %211 = vector.broadcast %cst_77 : f32 to vector<8x256xf32>
    %212 = arith.select %210, %206, %211 : vector<8x256xi1>, vector<8x256xf32>
    %c1_i32_78 = arith.constant 1 : i32
    %213 = tpu.dynamic_rotate %31 by %c1_i32_78 dim 1 : vector<8x256xf32>, i32 -> vector<8x256xf32>
    %c1_i32_79 = arith.constant 1 : i32
    %214 = vector.broadcast %c1_i32_79 : i32 to vector<1x256xi32>
    %215 = arith.cmpi sge, %18, %214 : vector<1x256xi32>
    %cst_80 = arith.constant 0.000000e+00 : f32
    %216 = vector.shape_cast %215 : vector<1x256xi1> to vector<1x256xi1>
    %217 = vector.broadcast %216 : vector<1x256xi1> to vector<8x256xi1>
    %218 = vector.broadcast %cst_80 : f32 to vector<8x256xf32>
    %219 = arith.select %217, %213, %218 : vector<8x256xi1>, vector<8x256xf32>
    %c255_i32_81 = arith.constant 255 : i32
    %220 = tpu.dynamic_rotate %31 by %c255_i32_81 dim 1 : vector<8x256xf32>, i32 -> vector<8x256xf32>
    %c15_i32_82 = arith.constant 15 : i32
    %221 = vector.broadcast %c15_i32_82 : i32 to vector<1x256xi32>
    %222 = arith.cmpi slt, %18, %221 : vector<1x256xi32>
    %cst_83 = arith.constant 0.000000e+00 : f32
    %223 = vector.shape_cast %222 : vector<1x256xi1> to vector<1x256xi1>
    %224 = vector.broadcast %223 : vector<1x256xi1> to vector<8x256xi1>
    %225 = vector.broadcast %cst_83 : f32 to vector<8x256xf32>
    %226 = arith.select %224, %220, %225 : vector<8x256xi1>, vector<8x256xf32>
    %c254_i32 = arith.constant 254 : i32
    %227 = tpu.dynamic_rotate %31 by %c254_i32 dim 1 : vector<8x256xf32>, i32 -> vector<8x256xf32>
    %c14_i32_84 = arith.constant 14 : i32
    %228 = vector.broadcast %c14_i32_84 : i32 to vector<1x256xi32>
    %229 = arith.cmpi slt, %18, %228 : vector<1x256xi32>
    %cst_85 = arith.constant 0.000000e+00 : f32
    %230 = vector.shape_cast %229 : vector<1x256xi1> to vector<1x256xi1>
    %231 = vector.broadcast %230 : vector<1x256xi1> to vector<8x256xi1>
    %232 = vector.broadcast %cst_85 : f32 to vector<8x256xf32>
    %233 = arith.select %231, %227, %232 : vector<8x256xi1>, vector<8x256xf32>
    %c242_i32 = arith.constant 242 : i32
    %234 = tpu.dynamic_rotate %31 by %c242_i32 dim 1 : vector<8x256xf32>, i32 -> vector<8x256xf32>
    %c240_i32_86 = arith.constant 240 : i32
    %235 = vector.broadcast %c240_i32_86 : i32 to vector<1x256xi32>
    %236 = arith.cmpi slt, %2, %235 : vector<1x256xi32>
    %c2_i32_87 = arith.constant 2 : i32
    %237 = vector.broadcast %c2_i32_87 : i32 to vector<1x256xi32>
    %238 = arith.cmpi sge, %18, %237 : vector<1x256xi32>
    %239 = arith.andi %236, %238 : vector<1x256xi1>
    %cst_88 = arith.constant 0.000000e+00 : f32
    %240 = vector.shape_cast %239 : vector<1x256xi1> to vector<1x256xi1>
    %241 = vector.broadcast %240 : vector<1x256xi1> to vector<8x256xi1>
    %242 = vector.broadcast %cst_88 : f32 to vector<8x256xf32>
    %243 = arith.select %241, %234, %242 : vector<8x256xi1>, vector<8x256xf32>
    %c241_i32_89 = arith.constant 241 : i32
    %244 = tpu.dynamic_rotate %31 by %c241_i32_89 dim 1 : vector<8x256xf32>, i32 -> vector<8x256xf32>
    %c240_i32_90 = arith.constant 240 : i32
    %245 = vector.broadcast %c240_i32_90 : i32 to vector<1x256xi32>
    %246 = arith.cmpi slt, %2, %245 : vector<1x256xi32>
    %c1_i32_91 = arith.constant 1 : i32
    %247 = vector.broadcast %c1_i32_91 : i32 to vector<1x256xi32>
    %248 = arith.cmpi sge, %18, %247 : vector<1x256xi32>
    %249 = arith.andi %246, %248 : vector<1x256xi1>
    %cst_92 = arith.constant 0.000000e+00 : f32
    %250 = vector.shape_cast %249 : vector<1x256xi1> to vector<1x256xi1>
    %251 = vector.broadcast %250 : vector<1x256xi1> to vector<8x256xi1>
    %252 = vector.broadcast %cst_92 : f32 to vector<8x256xf32>
    %253 = arith.select %251, %244, %252 : vector<8x256xi1>, vector<8x256xf32>
    %c240_i32_93 = arith.constant 240 : i32
    %254 = tpu.dynamic_rotate %31 by %c240_i32_93 dim 1 : vector<8x256xf32>, i32 -> vector<8x256xf32>
    %c240_i32_94 = arith.constant 240 : i32
    %255 = vector.broadcast %c240_i32_94 : i32 to vector<1x256xi32>
    %256 = arith.cmpi slt, %2, %255 : vector<1x256xi32>
    %cst_95 = arith.constant 0.000000e+00 : f32
    %257 = vector.shape_cast %256 : vector<1x256xi1> to vector<1x256xi1>
    %258 = vector.broadcast %257 : vector<1x256xi1> to vector<8x256xi1>
    %259 = vector.broadcast %cst_95 : f32 to vector<8x256xf32>
    %260 = arith.select %258, %254, %259 : vector<8x256xi1>, vector<8x256xf32>
    %c239_i32_96 = arith.constant 239 : i32
    %261 = tpu.dynamic_rotate %31 by %c239_i32_96 dim 1 : vector<8x256xf32>, i32 -> vector<8x256xf32>
    %c240_i32_97 = arith.constant 240 : i32
    %262 = vector.broadcast %c240_i32_97 : i32 to vector<1x256xi32>
    %263 = arith.cmpi slt, %2, %262 : vector<1x256xi32>
    %c15_i32_98 = arith.constant 15 : i32
    %264 = vector.broadcast %c15_i32_98 : i32 to vector<1x256xi32>
    %265 = arith.cmpi slt, %18, %264 : vector<1x256xi32>
    %266 = arith.andi %263, %265 : vector<1x256xi1>
    %cst_99 = arith.constant 0.000000e+00 : f32
    %267 = vector.shape_cast %266 : vector<1x256xi1> to vector<1x256xi1>
    %268 = vector.broadcast %267 : vector<1x256xi1> to vector<8x256xi1>
    %269 = vector.broadcast %cst_99 : f32 to vector<8x256xf32>
    %270 = arith.select %268, %261, %269 : vector<8x256xi1>, vector<8x256xf32>
    %c238_i32 = arith.constant 238 : i32
    %271 = tpu.dynamic_rotate %31 by %c238_i32 dim 1 : vector<8x256xf32>, i32 -> vector<8x256xf32>
    %c240_i32_100 = arith.constant 240 : i32
    %272 = vector.broadcast %c240_i32_100 : i32 to vector<1x256xi32>
    %273 = arith.cmpi slt, %2, %272 : vector<1x256xi32>
    %c14_i32_101 = arith.constant 14 : i32
    %274 = vector.broadcast %c14_i32_101 : i32 to vector<1x256xi32>
    %275 = arith.cmpi slt, %18, %274 : vector<1x256xi32>
    %276 = arith.andi %273, %275 : vector<1x256xi1>
    %cst_102 = arith.constant 0.000000e+00 : f32
    %277 = vector.shape_cast %276 : vector<1x256xi1> to vector<1x256xi1>
    %278 = vector.broadcast %277 : vector<1x256xi1> to vector<8x256xi1>
    %279 = vector.broadcast %cst_102 : f32 to vector<8x256xf32>
    %280 = arith.select %278, %271, %279 : vector<8x256xi1>, vector<8x256xf32>
    %c226_i32 = arith.constant 226 : i32
    %281 = tpu.dynamic_rotate %31 by %c226_i32 dim 1 : vector<8x256xf32>, i32 -> vector<8x256xf32>
    %c224_i32 = arith.constant 224 : i32
    %282 = vector.broadcast %c224_i32 : i32 to vector<1x256xi32>
    %283 = arith.cmpi slt, %2, %282 : vector<1x256xi32>
    %c2_i32_103 = arith.constant 2 : i32
    %284 = vector.broadcast %c2_i32_103 : i32 to vector<1x256xi32>
    %285 = arith.cmpi sge, %18, %284 : vector<1x256xi32>
    %286 = arith.andi %283, %285 : vector<1x256xi1>
    %cst_104 = arith.constant 0.000000e+00 : f32
    %287 = vector.shape_cast %286 : vector<1x256xi1> to vector<1x256xi1>
    %288 = vector.broadcast %287 : vector<1x256xi1> to vector<8x256xi1>
    %289 = vector.broadcast %cst_104 : f32 to vector<8x256xf32>
    %290 = arith.select %288, %281, %289 : vector<8x256xi1>, vector<8x256xf32>
    %c225_i32 = arith.constant 225 : i32
    %291 = tpu.dynamic_rotate %31 by %c225_i32 dim 1 : vector<8x256xf32>, i32 -> vector<8x256xf32>
    %c224_i32_105 = arith.constant 224 : i32
    %292 = vector.broadcast %c224_i32_105 : i32 to vector<1x256xi32>
    %293 = arith.cmpi slt, %2, %292 : vector<1x256xi32>
    %c1_i32_106 = arith.constant 1 : i32
    %294 = vector.broadcast %c1_i32_106 : i32 to vector<1x256xi32>
    %295 = arith.cmpi sge, %18, %294 : vector<1x256xi32>
    %296 = arith.andi %293, %295 : vector<1x256xi1>
    %cst_107 = arith.constant 0.000000e+00 : f32
    %297 = vector.shape_cast %296 : vector<1x256xi1> to vector<1x256xi1>
    %298 = vector.broadcast %297 : vector<1x256xi1> to vector<8x256xi1>
    %299 = vector.broadcast %cst_107 : f32 to vector<8x256xf32>
    %300 = arith.select %298, %291, %299 : vector<8x256xi1>, vector<8x256xf32>
    %c224_i32_108 = arith.constant 224 : i32
    %301 = tpu.dynamic_rotate %31 by %c224_i32_108 dim 1 : vector<8x256xf32>, i32 -> vector<8x256xf32>
    %c224_i32_109 = arith.constant 224 : i32
    %302 = vector.broadcast %c224_i32_109 : i32 to vector<1x256xi32>
    %303 = arith.cmpi slt, %2, %302 : vector<1x256xi32>
    %cst_110 = arith.constant 0.000000e+00 : f32
    %304 = vector.shape_cast %303 : vector<1x256xi1> to vector<1x256xi1>
    %305 = vector.broadcast %304 : vector<1x256xi1> to vector<8x256xi1>
    %306 = vector.broadcast %cst_110 : f32 to vector<8x256xf32>
    %307 = arith.select %305, %301, %306 : vector<8x256xi1>, vector<8x256xf32>
    %c223_i32 = arith.constant 223 : i32
    %308 = tpu.dynamic_rotate %31 by %c223_i32 dim 1 : vector<8x256xf32>, i32 -> vector<8x256xf32>
    %c224_i32_111 = arith.constant 224 : i32
    %309 = vector.broadcast %c224_i32_111 : i32 to vector<1x256xi32>
    %310 = arith.cmpi slt, %2, %309 : vector<1x256xi32>
    %c15_i32_112 = arith.constant 15 : i32
    %311 = vector.broadcast %c15_i32_112 : i32 to vector<1x256xi32>
    %312 = arith.cmpi slt, %18, %311 : vector<1x256xi32>
    %313 = arith.andi %310, %312 : vector<1x256xi1>
    %cst_113 = arith.constant 0.000000e+00 : f32
    %314 = vector.shape_cast %313 : vector<1x256xi1> to vector<1x256xi1>
    %315 = vector.broadcast %314 : vector<1x256xi1> to vector<8x256xi1>
    %316 = vector.broadcast %cst_113 : f32 to vector<8x256xf32>
    %317 = arith.select %315, %308, %316 : vector<8x256xi1>, vector<8x256xf32>
    %c222_i32 = arith.constant 222 : i32
    %318 = tpu.dynamic_rotate %31 by %c222_i32 dim 1 : vector<8x256xf32>, i32 -> vector<8x256xf32>
    %c224_i32_114 = arith.constant 224 : i32
    %319 = vector.broadcast %c224_i32_114 : i32 to vector<1x256xi32>
    %320 = arith.cmpi slt, %2, %319 : vector<1x256xi32>
    %c14_i32_115 = arith.constant 14 : i32
    %321 = vector.broadcast %c14_i32_115 : i32 to vector<1x256xi32>
    %322 = arith.cmpi slt, %18, %321 : vector<1x256xi32>
    %323 = arith.andi %320, %322 : vector<1x256xi1>
    %cst_116 = arith.constant 0.000000e+00 : f32
    %324 = vector.shape_cast %323 : vector<1x256xi1> to vector<1x256xi1>
    %325 = vector.broadcast %324 : vector<1x256xi1> to vector<8x256xi1>
    %326 = vector.broadcast %cst_116 : f32 to vector<8x256xf32>
    %327 = arith.select %325, %318, %326 : vector<8x256xi1>, vector<8x256xf32>
    %328 = tpu.concatenate %121, %131, %138, %148, %158, %168, %178, %185, %195, %205, %212, %219, %31, %226, %233, %243 in 0 : vector<8x256xf32>, vector<8x256xf32>, vector<8x256xf32>, vector<8x256xf32>, vector<8x256xf32>, vector<8x256xf32>, vector<8x256xf32>, vector<8x256xf32>, vector<8x256xf32>, vector<8x256xf32>, vector<8x256xf32>, vector<8x256xf32>, vector<8x256xf32>, vector<8x256xf32>, vector<8x256xf32>, vector<8x256xf32> -> vector<128x256xf32>
    %329 = tpu.concatenate %253, %260, %270, %280, %290, %300, %307, %317, %327 in 0 : vector<8x256xf32>, vector<8x256xf32>, vector<8x256xf32>, vector<8x256xf32>, vector<8x256xf32>, vector<8x256xf32>, vector<8x256xf32>, vector<8x256xf32>, vector<8x256xf32> -> vector<72x256xf32>
    %330 = tpu.concatenate %328, %329 in 0 : vector<128x256xf32>, vector<72x256xf32> -> vector<200x256xf32>
    %cst_117 = arith.constant dense<0.000000e+00> : vector<8x256xf32>
    %331 = tpu.matmul %111, %330, %cst_117 {dimension_numbers = #tpu.dot_dimension_numbers<[1], [0], [0], [1], [0, 0, 1, 1], [], []>} : vector<8x200xf32>, vector<200x256xf32>, vector<8x256xf32> -> vector<8x256xf32>
    %c0_118 = arith.constant 0 : index
    %c0_119 = arith.constant 0 : index
    %332 = vector.load %arg7[%c0_118, %c0_119] : memref<8x1xf32, #tpu.memory_space<vmem>>, vector<8x1xf32>
    %333 = vector.broadcast %332 : vector<8x1xf32> to vector<8x256xf32>
    %334 = arith.addf %331, %333 : vector<8x256xf32>
    %cst_120 = arith.constant 0.000000e+00 : f32
    %335 = vector.broadcast %cst_120 : f32 to vector<8x256xf32>
    %336 = arith.maximumf %334, %335 : vector<8x256xf32>
    %c0_121 = arith.constant 0 : index
    %c12 = arith.constant 12 : index
    %c0_122 = arith.constant 0 : index
    %337 = vector.load %arg10[%c0_121, %c12, %c0_122] : memref<1x24x256xf32, #tpu.memory_space<vmem>>, vector<1x8x256xf32>
    %338 = vector.shape_cast %337 : vector<1x8x256xf32> to vector<8x256xf32>
    %339 = vector.shape_cast %336 : vector<8x256xf32> to vector<1x8x256xf32>
    tpu.vector_store %arg10[%c0_121, %c12, %c0_122], %339 {strides = array<i32>} : memref<1x24x256xf32, #tpu.memory_space<vmem>>, vector<1x8x256xf32>,
    %c17_i32_123 = arith.constant 17 : i32
    %340 = tpu.dynamic_rotate %1 by %c17_i32_123 dim 1 : vector<4x256xf32>, i32 -> vector<4x256xf32>
    %c16_i32_124 = arith.constant 16 : i32
    %341 = vector.broadcast %c16_i32_124 : i32 to vector<1x256xi32>
    %342 = arith.cmpi sge, %2, %341 : vector<1x256xi32>
    %c1_i32_125 = arith.constant 1 : i32
    %343 = vector.broadcast %c1_i32_125 : i32 to vector<1x256xi32>
    %344 = arith.cmpi sge, %18, %343 : vector<1x256xi32>
    %345 = arith.andi %342, %344 : vector<1x256xi1>
    %346 = arith.maximumf %1, %340 : vector<4x256xf32>
    %347 = vector.shape_cast %345 : vector<1x256xi1> to vector<1x256xi1>
    %348 = vector.broadcast %347 : vector<1x256xi1> to vector<4x256xi1>
    %349 = arith.select %348, %346, %1 : vector<4x256xi1>, vector<4x256xf32>
    %c16_i32_126 = arith.constant 16 : i32
    %350 = tpu.dynamic_rotate %1 by %c16_i32_126 dim 1 : vector<4x256xf32>, i32 -> vector<4x256xf32>
    %c16_i32_127 = arith.constant 16 : i32
    %351 = vector.broadcast %c16_i32_127 : i32 to vector<1x256xi32>
    %352 = arith.cmpi sge, %2, %351 : vector<1x256xi32>
    %353 = arith.maximumf %349, %350 : vector<4x256xf32>
    %354 = vector.shape_cast %352 : vector<1x256xi1> to vector<1x256xi1>
    %355 = vector.broadcast %354 : vector<1x256xi1> to vector<4x256xi1>
    %356 = arith.select %355, %353, %349 : vector<4x256xi1>, vector<4x256xf32>
    %c15_i32_128 = arith.constant 15 : i32
    %357 = tpu.dynamic_rotate %1 by %c15_i32_128 dim 1 : vector<4x256xf32>, i32 -> vector<4x256xf32>
    %c16_i32_129 = arith.constant 16 : i32
    %358 = vector.broadcast %c16_i32_129 : i32 to vector<1x256xi32>
    %359 = arith.cmpi sge, %2, %358 : vector<1x256xi32>
    %c15_i32_130 = arith.constant 15 : i32
    %360 = vector.broadcast %c15_i32_130 : i32 to vector<1x256xi32>
    %361 = arith.cmpi slt, %18, %360 : vector<1x256xi32>
    %362 = arith.andi %359, %361 : vector<1x256xi1>
    %363 = arith.maximumf %356, %357 : vector<4x256xf32>
    %364 = vector.shape_cast %362 : vector<1x256xi1> to vector<1x256xi1>
    %365 = vector.broadcast %364 : vector<1x256xi1> to vector<4x256xi1>
    %366 = arith.select %365, %363, %356 : vector<4x256xi1>, vector<4x256xf32>
    %c1_i32_131 = arith.constant 1 : i32
    %367 = tpu.dynamic_rotate %1 by %c1_i32_131 dim 1 : vector<4x256xf32>, i32 -> vector<4x256xf32>
    %c1_i32_132 = arith.constant 1 : i32
    %368 = vector.broadcast %c1_i32_132 : i32 to vector<1x256xi32>
    %369 = arith.cmpi sge, %18, %368 : vector<1x256xi32>
    %370 = arith.maximumf %366, %367 : vector<4x256xf32>
    %371 = vector.shape_cast %369 : vector<1x256xi1> to vector<1x256xi1>
    %372 = vector.broadcast %371 : vector<1x256xi1> to vector<4x256xi1>
    %373 = arith.select %372, %370, %366 : vector<4x256xi1>, vector<4x256xf32>
    %c255_i32_133 = arith.constant 255 : i32
    %374 = tpu.dynamic_rotate %1 by %c255_i32_133 dim 1 : vector<4x256xf32>, i32 -> vector<4x256xf32>
    %c15_i32_134 = arith.constant 15 : i32
    %375 = vector.broadcast %c15_i32_134 : i32 to vector<1x256xi32>
    %376 = arith.cmpi slt, %18, %375 : vector<1x256xi32>
    %377 = arith.maximumf %373, %374 : vector<4x256xf32>
    %378 = vector.shape_cast %376 : vector<1x256xi1> to vector<1x256xi1>
    %379 = vector.broadcast %378 : vector<1x256xi1> to vector<4x256xi1>
    %380 = arith.select %379, %377, %373 : vector<4x256xi1>, vector<4x256xf32>
    %c241_i32_135 = arith.constant 241 : i32
    %381 = tpu.dynamic_rotate %1 by %c241_i32_135 dim 1 : vector<4x256xf32>, i32 -> vector<4x256xf32>
    %c240_i32_136 = arith.constant 240 : i32
    %382 = vector.broadcast %c240_i32_136 : i32 to vector<1x256xi32>
    %383 = arith.cmpi slt, %2, %382 : vector<1x256xi32>
    %c1_i32_137 = arith.constant 1 : i32
    %384 = vector.broadcast %c1_i32_137 : i32 to vector<1x256xi32>
    %385 = arith.cmpi sge, %18, %384 : vector<1x256xi32>
    %386 = arith.andi %383, %385 : vector<1x256xi1>
    %387 = arith.maximumf %380, %381 : vector<4x256xf32>
    %388 = vector.shape_cast %386 : vector<1x256xi1> to vector<1x256xi1>
    %389 = vector.broadcast %388 : vector<1x256xi1> to vector<4x256xi1>
    %390 = arith.select %389, %387, %380 : vector<4x256xi1>, vector<4x256xf32>
    %c240_i32_138 = arith.constant 240 : i32
    %391 = tpu.dynamic_rotate %1 by %c240_i32_138 dim 1 : vector<4x256xf32>, i32 -> vector<4x256xf32>
    %c240_i32_139 = arith.constant 240 : i32
    %392 = vector.broadcast %c240_i32_139 : i32 to vector<1x256xi32>
    %393 = arith.cmpi slt, %2, %392 : vector<1x256xi32>
    %394 = arith.maximumf %390, %391 : vector<4x256xf32>
    %395 = vector.shape_cast %393 : vector<1x256xi1> to vector<1x256xi1>
    %396 = vector.broadcast %395 : vector<1x256xi1> to vector<4x256xi1>
    %397 = arith.select %396, %394, %390 : vector<4x256xi1>, vector<4x256xf32>
    %c239_i32_140 = arith.constant 239 : i32
    %398 = tpu.dynamic_rotate %1 by %c239_i32_140 dim 1 : vector<4x256xf32>, i32 -> vector<4x256xf32>
    %c240_i32_141 = arith.constant 240 : i32
    %399 = vector.broadcast %c240_i32_141 : i32 to vector<1x256xi32>
    %400 = arith.cmpi slt, %2, %399 : vector<1x256xi32>
    %c15_i32_142 = arith.constant 15 : i32
    %401 = vector.broadcast %c15_i32_142 : i32 to vector<1x256xi32>
    %402 = arith.cmpi slt, %18, %401 : vector<1x256xi32>
    %403 = arith.andi %400, %402 : vector<1x256xi1>
    %404 = arith.maximumf %397, %398 : vector<4x256xf32>
    %405 = vector.shape_cast %403 : vector<1x256xi1> to vector<1x256xi1>
    %406 = vector.broadcast %405 : vector<1x256xi1> to vector<4x256xi1>
    %407 = arith.select %406, %404, %397 : vector<4x256xi1>, vector<4x256xf32>
    %c0_143 = arith.constant 0 : index
    %c0_144 = arith.constant 0 : index
    %408 = vector.load %arg8[%c0_143, %c0_144] : memref<4x4xf32, #tpu.memory_space<vmem>>, vector<4x4xf32>
    %cst_145 = arith.constant dense<0.000000e+00> : vector<4x256xf32>
    %409 = tpu.matmul %408, %407, %cst_145 {dimension_numbers = #tpu.dot_dimension_numbers<[1], [0], [0], [1], [0, 0, 1, 1], [], []>} : vector<4x4xf32>, vector<4x256xf32>, vector<4x256xf32> -> vector<4x256xf32>
    %c0_146 = arith.constant 0 : index
    %c0_147 = arith.constant 0 : index
    %410 = vector.load %arg9[%c0_146, %c0_147] : memref<4x1xf32, #tpu.memory_space<vmem>>, vector<4x1xf32>
    %411 = vector.broadcast %410 : vector<4x1xf32> to vector<4x256xf32>
    %412 = arith.addf %409, %411 : vector<4x256xf32>
    %cst_148 = arith.constant 0.000000e+00 : f32
    %413 = vector.broadcast %cst_148 : f32 to vector<4x256xf32>
    %414 = arith.maximumf %412, %413 : vector<4x256xf32>
    %c0_149 = arith.constant 0 : index
    %c20 = arith.constant 20 : index
    %c0_150 = arith.constant 0 : index
    %415 = vector.load %arg10[%c0_149, %c20, %c0_150] : memref<1x24x256xf32, #tpu.memory_space<vmem>>, vector<1x4x256xf32>
    %416 = vector.shape_cast %415 : vector<1x4x256xf32> to vector<4x256xf32>
    %417 = vector.shape_cast %414 : vector<4x256xf32> to vector<1x4x256xf32>
    tpu.vector_store %arg10[%c0_149, %c20, %c0_150], %417 {strides = array<i32>} : memref<1x24x256xf32, #tpu.memory_space<vmem>>, vector<1x4x256xf32>,
    return
  }
  func.func @transform_0(%arg0: i32) -> (i32, i32, i32) {
    %c0_i32 = arith.constant 0 : i32
    %c0_i32_0 = arith.constant 0 : i32
    %c0_i32_1 = arith.constant 0 : i32
    return %arg0, %c0_i32, %c0_i32_0 : i32, i32, i32
  }
  func.func @transform_1(%arg0: i32) -> (i32, i32) {
    %c0_i32 = arith.constant 0 : i32
    %c0_i32_0 = arith.constant 0 : i32
    %c0_i32_1 = arith.constant 0 : i32
    return %c0_i32, %c0_i32_0 : i32, i32
  }
  func.func @transform_2(%arg0: i32) -> (i32, i32) {
    %c0_i32 = arith.constant 0 : i32
    %c0_i32_0 = arith.constant 0 : i32
    %c0_i32_1 = arith.constant 0 : i32
    return %c0_i32, %c0_i32_0 : i32, i32
  }
  func.func @transform_3(%arg0: i32) -> (i32, i32) {
    %c0_i32 = arith.constant 0 : i32
    %c0_i32_0 = arith.constant 0 : i32
    %c0_i32_1 = arith.constant 0 : i32
    return %c0_i32, %c0_i32_0 : i32, i32
  }
  func.func @transform_4(%arg0: i32) -> (i32, i32) {
    %c0_i32 = arith.constant 0 : i32
    %c0_i32_0 = arith.constant 0 : i32
    %c0_i32_1 = arith.constant 0 : i32
    return %c0_i32, %c0_i32_0 : i32, i32
  }
  func.func @transform_5(%arg0: i32) -> (i32, i32) {
    %c0_i32 = arith.constant 0 : i32
    %c0_i32_0 = arith.constant 0 : i32
    %c0_i32_1 = arith.constant 0 : i32
    return %c0_i32, %c0_i32_0 : i32, i32
  }
  func.func @transform_6(%arg0: i32) -> (i32, i32) {
    %c0_i32 = arith.constant 0 : i32
    %c0_i32_0 = arith.constant 0 : i32
    %c0_i32_1 = arith.constant 0 : i32
    return %c0_i32, %c0_i32_0 : i32, i32
  }
  func.func @transform_7(%arg0: i32) -> (i32, i32) {
    %c0_i32 = arith.constant 0 : i32
    %c0_i32_0 = arith.constant 0 : i32
    %c0_i32_1 = arith.constant 0 : i32
    return %c0_i32, %c0_i32_0 : i32, i32
  }
  func.func @transform_8(%arg0: i32) -> (i32, i32) {
    %c0_i32 = arith.constant 0 : i32
    %c0_i32_0 = arith.constant 0 : i32
    %c0_i32_1 = arith.constant 0 : i32
    return %c0_i32, %c0_i32_0 : i32, i32
  }
  func.func @transform_9(%arg0: i32) -> (i32, i32, i32) {
    %c0_i32 = arith.constant 0 : i32
    %c0_i32_0 = arith.constant 0 : i32
    %c0_i32_1 = arith.constant 0 : i32
    return %arg0, %c0_i32, %c0_i32_0 : i32, i32, i32
  }
}

</mosaic_0001>

<llo_original>
// kernel: forward.1
$region0: #{forward.1}
  #allocation0 [shape = 'u32[]', space=smem, size = 0x4, offset = 0x4, fixed_abs, tag = 'smem constant byte address 0x4 - core index']
  #allocation1 [shape = 'u32[144,128]{1,0:T(1,128)}', space=vmem, size = 0x12000, scoped, tag = 'internal scratch']
  %s0 = inlined_call_operand.vmem [shape: f32[2,4,256], index: 0, kind: input, shape index: {}]
  %s1 = inlined_call_operand.vmem [shape: f32[24,4], index: 1, kind: input, shape index: {}]
  %s2 = inlined_call_operand.vmem [shape: f32[24,1], index: 2, kind: input, shape index: {}]
  %s3 = inlined_call_operand.vmem [shape: f32[8,72], index: 3, kind: input, shape index: {}]
  %s4 = inlined_call_operand.vmem [shape: f32[8,1], index: 4, kind: input, shape index: {}]
  %s5 = inlined_call_operand.vmem [shape: f32[8,200], index: 5, kind: input, shape index: {}]
  %s6 = inlined_call_operand.vmem [shape: f32[8,1], index: 6, kind: input, shape index: {}]
  %s7 = inlined_call_operand.vmem [shape: f32[4,4], index: 7, kind: input, shape index: {}]
  %s8 = inlined_call_operand.vmem [shape: f32[4,1], index: 8, kind: input, shape index: {}]
  %s9 = inlined_call_operand.vmem [shape: f32[2,24,256], index: 9, kind: output, shape index: {}]
  %s10 = sld [smem:[#allocation0]]
  $region69: #{forward.1} parent=0
    _
  %s12 = ssub.s32 1, %s10
  %s13 = scalar_select 0, %s12, %s10
  loop: start=0, step=1, limit=4
  $region2: #{forward.1} parent=0 // loop_pre_header
    _
  $region3: #{forward.1} parent=0 // loop_header
    %s15 = sphi 0, %s19
    %p16 = scmp.ge.s32.totalorder %s15, 4
    %s25 = sphi 0, %s27
    %s28 = sphi 0, %s25
    %s29 = sphi 0, %s28
    %s45 = sphi 0, %s29
    %s49 = sphi 0, %s49
    %s51 = sphi 0, %s49
    %s52 = sphi 0, %s51
    %s66 = sphi 0, %s52
    %s70 = sphi 0, %s70
    %s72 = sphi 0, %s70
    %s73 = sphi 0, %s72
    %s87 = sphi 0, %s73
    %s91 = sphi 0, %s91
    %s93 = sphi 0, %s91
    %s94 = sphi 0, %s93
    %s108 = sphi 0, %s94
    %s112 = sphi 0, %s112
    %s114 = sphi 0, %s112
    %s115 = sphi 0, %s114
    %s129 = sphi 0, %s115
    %s133 = sphi 0, %s133
    %s135 = sphi 0, %s133
    %s136 = sphi 0, %s135
    %s150 = sphi 0, %s136
    %s154 = sphi 0, %s154
    %s156 = sphi 0, %s154
    %s157 = sphi 0, %s156
    %s171 = sphi 0, %s157
    %s175 = sphi 0, %s175
    %s177 = sphi 0, %s175
    %s178 = sphi 0, %s177
    %s192 = sphi 0, %s178
    %s196 = sphi 0, %s196
    %s198 = sphi 0, %s196
    %s199 = sphi 0, %s198
    %s213 = sphi 0, %s199
    %s219 = sphi 0, %s221
    %s222 = sphi 0, %s219
    %s223 = sphi 0, %s222
    %s239 = sphi 0, %s223
  $region4: #{forward.1} parent=0 // loop_header_branch
    %18 = sbr.rel (%p16) target = $region8
  $region5: #{forward.1} parent=0 // loop_body
    %s20 = ssub.s32 %s15, 1
    %s21 = ssub.s32 %s15, 2
    %s22 = sadd.s32 %s15, 1
    %s23 = ssub.s32 %s15, %s22
    %p24 = scmp.eq.s32.totalorder %s23, 0
    %s26 = sadd.s32 %s25, 1
    %s27 = scalar_select %p24, %s25, %s26
    %p30 = pneg %p24
    %p31 = scmp.eq.s32.totalorder %s15, 1
    %p32 = por %p30, %p31
    %p33 = scmp.ne.s32.totalorder %s25, %s28
    %p34 = scmp.eq.s32.totalorder %s15, 0
    %p35 = por %p33, %p34
    %p36 = scmp.ne.s32.totalorder %s25, %s28
    %p37 = scmp.eq.s32.totalorder %s20, 1
    %p38 = por %p36, %p37
    %p39 = scmp.ne.s32.totalorder %s28, %s29
    %p40 = scmp.eq.s32.totalorder %s20, 0
    %p41 = por %p39, %p40
    %p42 = scmp.ne.s32.totalorder %s28, %s29
    %p43 = scmp.eq.s32.totalorder %s21, 1
    %p44 = por %p42, %p43
    %p46 = scmp.ne.s32.totalorder %s29, %s45
    %p47 = scmp.eq.s32.totalorder %s21, 0
    %p48 = por %p46, %p47
    %s50 = sadd.s32 %s49, 1
    %p53 = scmp.eq.s32.totalorder %s15, 1
    %p54 = scmp.ne.s32.totalorder %s49, %s51
    %p55 = scmp.eq.s32.totalorder %s15, 0
    %p56 = por %p54, %p55
    %p57 = scmp.ne.s32.totalorder %s49, %s51
    %p58 = scmp.eq.s32.totalorder %s20, 1
    %p59 = por %p57, %p58
    %p60 = scmp.ne.s32.totalorder %s51, %s52
    %p61 = scmp.eq.s32.totalorder %s20, 0
    %p62 = por %p60, %p61
    %p63 = scmp.ne.s32.totalorder %s51, %s52
    %p64 = scmp.eq.s32.totalorder %s21, 1
    %p65 = por %p63, %p64
    %p67 = scmp.ne.s32.totalorder %s52, %s66
    %p68 = scmp.eq.s32.totalorder %s21, 0
    %p69 = por %p67, %p68
    %s71 = sadd.s32 %s70, 1
    %p74 = scmp.eq.s32.totalorder %s15, 1
    %p75 = scmp.ne.s32.totalorder %s70, %s72
    %p76 = scmp.eq.s32.totalorder %s15, 0
    %p77 = por %p75, %p76
    %p78 = scmp.ne.s32.totalorder %s70, %s72
    %p79 = scmp.eq.s32.totalorder %s20, 1
    %p80 = por %p78, %p79
    %p81 = scmp.ne.s32.totalorder %s72, %s73
    %p82 = scmp.eq.s32.totalorder %s20, 0
    %p83 = por %p81, %p82
    %p84 = scmp.ne.s32.totalorder %s72, %s73
    %p85 = scmp.eq.s32.totalorder %s21, 1
    %p86 = por %p84, %p85
    %p88 = scmp.ne.s32.totalorder %s73, %s87
    %p89 = scmp.eq.s32.totalorder %s21, 0
    %p90 = por %p88, %p89
    %s92 = sadd.s32 %s91, 1
    %p95 = scmp.eq.s32.totalorder %s15, 1
    %p96 = scmp.ne.s32.totalorder %s91, %s93
    %p97 = scmp.eq.s32.totalorder %s15, 0
    %p98 = por %p96, %p97
    %p99 = scmp.ne.s32.totalorder %s91, %s93
    %p100 = scmp.eq.s32.totalorder %s20, 1
    %p101 = por %p99, %p100
    %p102 = scmp.ne.s32.totalorder %s93, %s94
    %p103 = scmp.eq.s32.totalorder %s20, 0
    %p104 = por %p102, %p103
    %p105 = scmp.ne.s32.totalorder %s93, %s94
    %p106 = scmp.eq.s32.totalorder %s21, 1
    %p107 = por %p105, %p106
    %p109 = scmp.ne.s32.totalorder %s94, %s108
    %p110 = scmp.eq.s32.totalorder %s21, 0
    %p111 = por %p109, %p110
    %s113 = sadd.s32 %s112, 1
    %p116 = scmp.eq.s32.totalorder %s15, 1
    %p117 = scmp.ne.s32.totalorder %s112, %s114
    %p118 = scmp.eq.s32.totalorder %s15, 0
    %p119 = por %p117, %p118
    %p120 = scmp.ne.s32.totalorder %s112, %s114
    %p121 = scmp.eq.s32.totalorder %s20, 1
    %p122 = por %p120, %p121
    %p123 = scmp.ne.s32.totalorder %s114, %s115
    %p124 = scmp.eq.s32.totalorder %s20, 0
    %p125 = por %p123, %p124
    %p126 = scmp.ne.s32.totalorder %s114, %s115
    %p127 = scmp.eq.s32.totalorder %s21, 1
    %p128 = por %p126, %p127
    %p130 = scmp.ne.s32.totalorder %s115, %s129
    %p131 = scmp.eq.s32.totalorder %s21, 0
    %p132 = por %p130, %p131
    %s134 = sadd.s32 %s133, 1
    %p137 = scmp.eq.s32.totalorder %s15, 1
    %p138 = scmp.ne.s32.totalorder %s133, %s135
    %p139 = scmp.eq.s32.totalorder %s15, 0
    %p140 = por %p138, %p139
    %p141 = scmp.ne.s32.totalorder %s133, %s135
    %p142 = scmp.eq.s32.totalorder %s20, 1
    %p143 = por %p141, %p142
    %p144 = scmp.ne.s32.totalorder %s135, %s136
    %p145 = scmp.eq.s32.totalorder %s20, 0
    %p146 = por %p144, %p145
    %p147 = scmp.ne.s32.totalorder %s135, %s136
    %p148 = scmp.eq.s32.totalorder %s21, 1
    %p149 = por %p147, %p148
    %p151 = scmp.ne.s32.totalorder %s136, %s150
    %p152 = scmp.eq.s32.totalorder %s21, 0
    %p153 = por %p151, %p152
    %s155 = sadd.s32 %s154, 1
    %p158 = scmp.eq.s32.totalorder %s15, 1
    %p159 = scmp.ne.s32.totalorder %s154, %s156
    %p160 = scmp.eq.s32.totalorder %s15, 0
    %p161 = por %p159, %p160
    %p162 = scmp.ne.s32.totalorder %s154, %s156
    %p163 = scmp.eq.s32.totalorder %s20, 1
    %p164 = por %p162, %p163
    %p165 = scmp.ne.s32.totalorder %s156, %s157
    %p166 = scmp.eq.s32.totalorder %s20, 0
    %p167 = por %p165, %p166
    %p168 = scmp.ne.s32.totalorder %s156, %s157
    %p169 = scmp.eq.s32.totalorder %s21, 1
    %p170 = por %p168, %p169
    %p172 = scmp.ne.s32.totalorder %s157, %s171
    %p173 = scmp.eq.s32.totalorder %s21, 0
    %p174 = por %p172, %p173
    %s176 = sadd.s32 %s175, 1
    %p179 = scmp.eq.s32.totalorder %s15, 1
    %p180 = scmp.ne.s32.totalorder %s175, %s177
    %p181 = scmp.eq.s32.totalorder %s15, 0
    %p182 = por %p180, %p181
    %p183 = scmp.ne.s32.totalorder %s175, %s177
    %p184 = scmp.eq.s32.totalorder %s20, 1
    %p185 = por %p183, %p184
    %p186 = scmp.ne.s32.totalorder %s177, %s178
    %p187 = scmp.eq.s32.totalorder %s20, 0
    %p188 = por %p186, %p187
    %p189 = scmp.ne.s32.totalorder %s177, %s178
    %p190 = scmp.eq.s32.totalorder %s21, 1
    %p191 = por %p189, %p190
    %p193 = scmp.ne.s32.totalorder %s178, %s192
    %p194 = scmp.eq.s32.totalorder %s21, 0
    %p195 = por %p193, %p194
    %s197 = sadd.s32 %s196, 1
    %p200 = scmp.eq.s32.totalorder %s15, 1
    %p201 = scmp.ne.s32.totalorder %s196, %s198
    %p202 = scmp.eq.s32.totalorder %s15, 0
    %p203 = por %p201, %p202
    %p204 = scmp.ne.s32.totalorder %s196, %s198
    %p205 = scmp.eq.s32.totalorder %s20, 1
    %p206 = por %p204, %p205
    %p207 = scmp.ne.s32.totalorder %s198, %s199
    %p208 = scmp.eq.s32.totalorder %s20, 0
    %p209 = por %p207, %p208
    %p210 = scmp.ne.s32.totalorder %s198, %s199
    %p211 = scmp.eq.s32.totalorder %s21, 1
    %p212 = por %p210, %p211
    %p214 = scmp.ne.s32.totalorder %s199, %s213
    %p215 = scmp.eq.s32.totalorder %s21, 0
    %p216 = por %p214, %p215
    %s217 = ssub.s32 %s15, %s22
    %p218 = scmp.eq.s32.totalorder %s217, 0
    %s220 = sadd.s32 %s219, 1
    %s221 = scalar_select %p218, %s219, %s220
    %p224 = pneg %p218
    %p225 = scmp.eq.s32.totalorder %s15, 1
    %p226 = por %p224, %p225
    %p227 = scmp.ne.s32.totalorder %s219, %s222
    %p228 = scmp.eq.s32.totalorder %s15, 0
    %p229 = por %p227, %p228
    %p230 = scmp.ne.s32.totalorder %s219, %s222
    %p231 = scmp.eq.s32.totalorder %s20, 1
    %p232 = por %p230, %p231
    %p233 = scmp.ne.s32.totalorder %s222, %s223
    %p234 = scmp.eq.s32.totalorder %s20, 0
    %p235 = por %p233, %p234
    %p236 = scmp.ne.s32.totalorder %s222, %s223
    %p237 = scmp.eq.s32.totalorder %s21, 1
    %p238 = por %p236, %p237
    %p240 = scmp.ne.s32.totalorder %s223, %s239
    %p241 = scmp.eq.s32.totalorder %s21, 0
    %p242 = por %p240, %p241
    %p243 = scmp.le.s32.totalorder 1, %s15
    %p244 = scmp.lt.s32.totalorder %s15, 3
    %p245 = pnand %p243, %p244
    %p246 = pneg %p245
    // Predicated region
    $region9: #{forward.1} parent=5 // pred_check
      _
    $region10: #{forward.1} parent=5 // pred_check_branch
      %248 = sbr.rel (%p245) target = $region12
    $region11: #{forward.1} parent=5 // pred_region
      %s249 = ssub.s32 %s15, 1
      // Predicated region
      $region13: #{forward.1} parent=11 // pred_check
        %p250 = pneg %p62
      $region14: #{forward.1} parent=11 // pred_check_branch
        %252 = sbr.rel (%p250) target = $region16
      $region15: #{forward.1} parent=11 // pred_region
        _
      $region16: #{forward.1} parent=11 // pred_fallthru
        _
      // Predicated region
      $region17: #{forward.1} parent=11 // pred_check
        %p253 = pneg %p83
      $region18: #{forward.1} parent=11 // pred_check_branch
        %255 = sbr.rel (%p253) target = $region20
      $region19: #{forward.1} parent=11 // pred_region
        _
      $region20: #{forward.1} parent=11 // pred_fallthru
        _
      // Predicated region
      $region21: #{forward.1} parent=11 // pred_check
        %p256 = pneg %p104
      $region22: #{forward.1} parent=11 // pred_check_branch
        %258 = sbr.rel (%p256) target = $region24
      $region23: #{forward.1} parent=11 // pred_region
        _
      $region24: #{forward.1} parent=11 // pred_fallthru
        _
      // Predicated region
      $region25: #{forward.1} parent=11 // pred_check
        %p259 = pneg %p125
      $region26: #{forward.1} parent=11 // pred_check_branch
        %261 = sbr.rel (%p259) target = $region28
      $region27: #{forward.1} parent=11 // pred_region
        _
      $region28: #{forward.1} parent=11 // pred_fallthru
        _
      // Predicated region
      $region29: #{forward.1} parent=11 // pred_check
        %p262 = pneg %p146
      $region30: #{forward.1} parent=11 // pred_check_branch
        %264 = sbr.rel (%p262) target = $region32
      $region31: #{forward.1} parent=11 // pred_region
        _
      $region32: #{forward.1} parent=11 // pred_fallthru
        _
      // Predicated region
      $region33: #{forward.1} parent=11 // pred_check
        %p265 = pneg %p167
      $region34: #{forward.1} parent=11 // pred_check_branch
        %267 = sbr.rel (%p265) target = $region36
      $region35: #{forward.1} parent=11 // pred_region
        _
      $region36: #{forward.1} parent=11 // pred_fallthru
        _
      // Predicated region
      $region37: #{forward.1} parent=11 // pred_check
        %p268 = pneg %p188
      $region38: #{forward.1} parent=11 // pred_check_branch
        %270 = sbr.rel (%p268) target = $region40
      $region39: #{forward.1} parent=11 // pred_region
        _
      $region40: #{forward.1} parent=11 // pred_fallthru
        _
      // Predicated region
      $region41: #{forward.1} parent=11 // pred_check
        %p271 = pneg %p209
      $region42: #{forward.1} parent=11 // pred_check_branch
        %273 = sbr.rel (%p271) target = $region44
      $region43: #{forward.1} parent=11 // pred_region
        _
      $region44: #{forward.1} parent=11 // pred_fallthru
        _
    $region12: #{forward.1} parent=5 // pred_fallthru
      _
    %p274 = scmp.lt.s32.totalorder %s15, 2
    // Predicated region
    $region45: #{forward.1} parent=5 // pred_check
      %p275 = pneg %p274
    $region46: #{forward.1} parent=5 // pred_check_branch
      %277 = sbr.rel (%p275) target = $region48
    $region47: #{forward.1} parent=5 // pred_region
      // Predicated region
      $region49: #{forward.1} parent=47 // pred_check
        %p278 = pneg %p35
      $region50: #{forward.1} parent=47 // pred_check_branch
        %280 = sbr.rel (%p278) target = $region52
      $region51: #{forward.1} parent=47 // pred_region
        %p281 = scmp.lt.s32.totalorder %s15, 1
        %s282 = scalar_select %p281, %s15, 1
        %s283 = smul.addr %s282, 2
        %s284 = smul.addr %s283, 4
        %s285 = scalar_lea.vmem %s0, %s284
      $region52: #{forward.1} parent=47 // pred_fallthru
        _
    $region48: #{forward.1} parent=5 // pred_fallthru
      _
    %p286 = scmp.le.s32.totalorder 1, %s15
    %p287 = scmp.lt.s32.totalorder %s15, 3
    %p288 = pnand %p286, %p287
    %p289 = pneg %p288
    // Predicated region
    $region53: #{forward.1} parent=5 // pred_check
      _
    $region54: #{forward.1} parent=5 // pred_check_branch
      %291 = sbr.rel (%p288) target = $region56
    $region55: #{forward.1} parent=5 // pred_region
      %s292 = ssub.s32 %s15, 1
      %p293 = scmp.lt.s32.totalorder %s20, 1
      %s294 = scalar_select %p293, %s20, 1
      %s295 = smul.addr %s294, 2
      %s296 = smul.addr %s295, 4
      %s297 = scalar_lea.vmem %s0, %s296
      %p298 = pneg %p41
      %p299 = pneg %p38
      %p300 = pneg %p62
      %p301 = pneg %p59
      %p302 = pneg %p83
      %p303 = pneg %p80
      %p304 = pneg %p104
      %p305 = pneg %p101
      %p306 = pneg %p125
      %p307 = pneg %p122
      %p308 = pneg %p146
      %p309 = pneg %p143
      %p310 = pneg %p167
      %p311 = pneg %p164
      %p312 = pneg %p188
      %p313 = pneg %p185
      %p314 = pneg %p209
      %p315 = pneg %p206
      %p316 = pneg %p235
      %p317 = pneg %p232
      %p318 = scmp.lt.s32.totalorder %s20, 1
      %s319 = scalar_select %p318, %s20, 1
      %s320 = smul.addr %s319, 6
      %s321 = smul.addr %s320, 8
      %s322 = scalar_lea.vmem %s9, %s321
      %p323 = scmp.lt.s32.totalorder %s20, 1
      %s324 = scalar_select %p323, %s20, 1
      %s325 = smul.addr %s324, 2
      %s326 = smul.addr %s325, 4
      %s327 = scalar_lea.vmem %s0, %s326
      %p328 = scmp.lt.s32.totalorder %s20, 1
      %s329 = scalar_select %p328, %s20, 1
      %s330 = smul.addr %s329, 6
      %s331 = smul.addr %s330, 8
      %s332 = scalar_lea.vmem %s9, %s331
      %v333 = vld [vmem:[%s327] sm:$0xff]
      %v334 = vlaneseq
      %v335 = vand.u32 %v334, 127
      %v336 = vadd.s32 %v335, 128
      %vm337 = vcmp.lt.s32.totalorder %v335, 0
      %v338 = vsub.s32 0, %v335
      %v339 = vsel %vm337, %v338, %v335
      %v340 = vshrl.u32 %v339, 4
      %v341 = vand.u32 %v339, 15
      %v342 = vsub.s32 0, %v341
      %v343 = vsel %vm337, %v342, %v341
      %vm344 = vcmp.lt.s32.totalorder %v336, 0
      %v345 = vsub.s32 0, %v336
      %v346 = vsel %vm344, %v345, %v336
      %v347 = vshrl.u32 %v346, 4
      %v348 = vand.u32 %v346, 15
      %v349 = vsub.s32 0, %v348
      %v350 = vsel %vm344, %v349, %v348
      %vm351 = vcmp.ne.s32.totalorder %v343, 0
      %vm352 = vcmp.ne.s32.totalorder %v350, 0
      %vm353 = vcmp.lt.s32.totalorder %v343, 0
      %vm354 = vcmp.lt.s32.totalorder %v350, 0
      %vm355 = vmand %vm353, %vm351
      %vm356 = vmand %vm354, %vm352
      %v357 = vadd.s32 %v343, 16
      %v358 = vadd.s32 %v350, 16
      %v359 = vsel %vm355, %v357, %v343
      %v360 = vsel %vm356, %v358, %v350
      %v361 = vld [vmem:[%s1] sm:$0xff]
      %v362 = vld [vmem:[%s1 + $0x8] sm:$0xff]
      %v363 = vld [vmem:[%s1 + $0x10] sm:$0xff]
      %v364 = vld [vmem:[%s2] sm:$0xff]
      %v365 = vld [vmem:[%s2 + $0x8] sm:$0xff]
      %v366 = vld [vmem:[%s2 + $0x10] sm:$0xff]
      %368 = vset.pattern.permute.xlu0 0
      %369 = vperm.xlu0 %368, %v364
      %v370 = vpop.permute.xlu0 %369
      %373 = vset.pattern.permute.xlu0 0
      %374 = vperm.xlu0 %373, %v365
      %v375 = vpop.permute.xlu0 %374
      %378 = vset.pattern.permute.xlu0 0
      %379 = vperm.xlu0 %378, %v366
      %v380 = vpop.permute.xlu0 %379
      %v383 = vcombine.high %v333, %v333
      %vm384 = vcmask 31744
      %v386 = vsel %vm384, %v361, 0
      %v389 = vsel %vm384, %v362, 0
      %v392 = vsel %vm384, %v363, 0
      %vm394 = vcmask 1043456
      %v395 = vsel %vm394, %v333, 0
      %v397 = vsel %vm394, %v383, 0
      %399 = vmatprep.subr.mxu0 %v397
      %400 = vmatpush1.msra.mxu0 %v395
      %401 = vmatprep.subr.mxu0 0.0
      %402 = vmatpush1.msra.mxu0 0.0
      %403 = vmatprep.subr.mxu0 0.0
      %404 = vmatpush1.msra.mxu0 0.0
      %405 = vmatprep.subr.mxu0 0.0
      %406 = vmatpush1.msra.mxu0 0.0
      %407 = vmatprep.subr.mxu0 0.0
      %408 = vmatpush1.msra.mxu0 0.0
      %409 = vmatprep.subr.mxu0 0.0
      %410 = vmatpush1.msra.mxu0 0.0
      %411 = vmatprep.subr.mxu0 0.0
      %412 = vmatpush1.msra.mxu0 0.0
      %413 = vmatprep.subr.mxu0 0.0
      %414 = vmatpush1.msra.mxu0 0.0
      %415 = vmatprep.subr.mxu0 0.0
      %416 = vmatpush1.msra.mxu0 0.0
      %417 = vmatprep.subr.mxu0 0.0
      %418 = vmatpush1.msra.mxu0 0.0
      %419 = vmatprep.subr.mxu0 0.0
      %420 = vmatpush1.msra.mxu0 0.0
      %421 = vmatprep.subr.mxu0 0.0
      %422 = vmatpush1.msra.mxu0 0.0
      %423 = vmatprep.subr.mxu0 0.0
      %424 = vmatpush1.msra.mxu0 0.0
      %425 = vmatprep.subr.mxu0 0.0
      %426 = vmatpush1.msra.mxu0 0.0
      %427 = vmatprep.subr.mxu0 0.0
      %428 = vmatpush1.msra.mxu0 0.0
      %429 = vmatprep.subr.mxu0 0.0
      %430 = vmatpush1.msra.mxu0 0.0
      %431 = vmatprep.subr.mxu0 0.0
      %432 = vmatpush1.msra.mxu0 0.0
      %433 = vmatprep.subr.mxu0 0.0
      %434 = vmatpush1.msra.mxu0 0.0
      %435 = vmatprep.subr.mxu0 0.0
      %436 = vmatpush1.msra.mxu0 0.0
      %437 = vmatprep.subr.mxu0 0.0
      %438 = vmatpush1.msra.mxu0 0.0
      %439 = vmatprep.subr.mxu0 0.0
      %440 = vmatpush1.msra.mxu0 0.0
      %441 = vmatprep.subr.mxu0 0.0
      %442 = vmatpush1.msra.mxu0 0.0
      %443 = vmatprep.subr.mxu0 0.0
      %444 = vmatpush1.msra.mxu0 0.0
      %445 = vmatprep.subr.mxu0 0.0
      %446 = vmatpush1.msra.mxu0 0.0
      %447 = vmatprep.subr.mxu0 0.0
      %448 = vmatpush1.msra.mxu0 0.0
      %449 = vmatprep.subr.mxu0 0.0
      %450 = vmatpush1.msra.mxu0 0.0
      %451 = vmatprep.subr.mxu0 0.0
      %452 = vmatpush1.msra.mxu0 0.0
      %453 = vmatprep.subr.mxu0 0.0
      %454 = vmatpush1.msra.mxu0 0.0
      %455 = vmatprep.subr.mxu0 0.0
      %456 = vmatpush1.msra.mxu0 0.0
      %457 = vmatprep.subr.mxu0 0.0
      %458 = vmatpush1.msra.mxu0 0.0
      %459 = vmatprep.subr.mxu0 0.0
      %460 = vmatpush1.msra.mxu0 0.0
      %461 = vmatprep.subr.mxu0 0.0
      %462 = vmatpush1.msra.mxu0 0.0
      %463 = vmatprep.mubr.f32.mxu0 0.0
      %464 = vmatmul.mubr.f32.gmra.mrb[0].mxu0 %v386
      %v465 = vpop.f32.mrb[0].mxu0
      %v466 = vadd.f32 %v370, %v465
      %v467 = vpop.f32.mrb[0].mxu0
      %v468 = vadd.f32 %v370, %v467
      %469 = vmatprep.mubr.f32.mxu0 0.0
      %470 = vmatmul.mubr.f32.gmra.mrb[0].mxu0 %v389
      %v471 = vpop.f32.mrb[0].mxu0
      %v472 = vadd.f32 %v375, %v471
      %v473 = vpop.f32.mrb[0].mxu0
      %v474 = vadd.f32 %v375, %v473
      %475 = vmatprep.mubr.f32.mxu0 0.0
      %476 = vmatmul.mubr.f32.gmra.mrb[0].mxu0 %v392
      %v477 = vpop.f32.mrb[0].mxu0
      %v478 = vadd.f32 %v380, %v477
      %v479 = vpop.f32.mrb[0].mxu0
      %v480 = vadd.f32 %v380, %v479
      %481 = vdwg.mxu0
      %v482 = vmax.f32 %v466, 0.0
      %v483 = vmax.f32 %v468, 0.0
      %v484 = vmax.f32 %v472, 0.0
      %v485 = vmax.f32 %v474, 0.0
      %v486 = vmax.f32 %v478, 0.0
      %v487 = vmax.f32 %v480, 0.0
      %488 = vst [vmem:[%s332] sm:$0xf] %v482
      %489 = vst [vmem:[%s332 + $0x8] sm:$0xf] %v483
      %v490 = vld [vmem:[%s3] sm:$0xff]
      %491 = vrot.lane.b32.xlu0 %v484, 17
      %v492 = vpop.permute.xlu0 %491
      %493 = vrot.lane.b32.xlu0 %v485, 17
      %v494 = vpop.permute.xlu0 %493
      %vm495 = vcmp.lt.s32.totalorder %v335, 17
      %v496 = vsel %vm495, %v492, %v494
      %v497 = vsel %vm495, %v494, %v492
      %vm498 = vcmp.ge.s32.totalorder %v335, 16
      %vm499 = vcmp.ge.s32.totalorder %v336, 16
      %vm500 = vcmp.ge.s32.totalorder %v359, 1
      %vm501 = vcmp.ge.s32.totalorder %v360, 1
      %vm502 = vmand %vm498, %vm500
      %vm503 = vmand %vm499, %vm501
      %v504 = vsel %vm502, 1, 0
      %v505 = vsel %vm503, 1, 0
      %vm506 = vcmp.eq.s32.totalorder %v504, 1
      %vm507 = vcmp.eq.s32.totalorder %v505, 1
      %v508 = vsel %vm506, %v497, 0.0
      %v509 = vsel %vm507, %v496, 0.0
      %510 = vrot.lane.b32.xlu0 %v484, 16
      %v511 = vpop.permute.xlu0 %510
      %512 = vrot.lane.b32.xlu0 %v485, 16
      %v513 = vpop.permute.xlu0 %512
      %vm514 = vcmp.lt.s32.totalorder %v335, 16
      %v515 = vsel %vm514, %v511, %v513
      %v516 = vsel %vm514, %v513, %v511
      %v517 = vsel %vm498, 1, 0
      %v518 = vsel %vm499, 1, 0
      %vm519 = vcmp.eq.s32.totalorder %v517, 1
      %vm520 = vcmp.eq.s32.totalorder %v518, 1
      %v521 = vsel %vm519, %v516, 0.0
      %v522 = vsel %vm520, %v515, 0.0
      %523 = vrot.lane.b32.xlu0 %v484, 15
      %v524 = vpop.permute.xlu0 %523
      %525 = vrot.lane.b32.xlu0 %v485, 15
      %v526 = vpop.permute.xlu0 %525
      %vm527 = vcmp.lt.s32.totalorder %v335, 15
      %v528 = vsel %vm527, %v524, %v526
      %v529 = vsel %vm527, %v526, %v524
      %vm530 = vcmp.lt.s32.totalorder %v359, 15
      %vm531 = vcmp.lt.s32.totalorder %v360, 15
      %vm532 = vmand %vm498, %vm530
      %vm533 = vmand %vm499, %vm531
      %v534 = vsel %vm532, 1, 0
      %v535 = vsel %vm533, 1, 0
      %vm536 = vcmp.eq.s32.totalorder %v534, 1
      %vm537 = vcmp.eq.s32.totalorder %v535, 1
      %v538 = vsel %vm536, %v529, 0.0
      %v539 = vsel %vm537, %v528, 0.0
      %540 = vrot.lane.b32.xlu0 %v484, 1
      %v541 = vpop.permute.xlu0 %540
      %542 = vrot.lane.b32.xlu0 %v485, 1
      %v543 = vpop.permute.xlu0 %542
      %vm544 = vcmp.lt.s32.totalorder %v335, 1
      %v545 = vsel %vm544, %v541, %v543
      %v546 = vsel %vm544, %v543, %v541
      %v547 = vsel %vm500, 1, 0
      %v548 = vsel %vm501, 1, 0
      %vm549 = vcmp.eq.s32.totalorder %v547, 1
      %vm550 = vcmp.eq.s32.totalorder %v548, 1
      %v551 = vsel %vm549, %v546, 0.0
      %v552 = vsel %vm550, %v545, 0.0
      %553 = vrot.lane.b32.xlu0 %v484, 127
      %v554 = vpop.permute.xlu0 %553
      %555 = vrot.lane.b32.xlu0 %v485, 127
      %v556 = vpop.permute.xlu0 %555
      %vm557 = vcmp.lt.s32.totalorder %v335, 127
      %v558 = vsel %vm557, %v554, %v556
      %v559 = vsel %vm557, %v556, %v554
      %v560 = vsel %vm530, 1, 0
      %v561 = vsel %vm531, 1, 0
      %vm562 = vcmp.eq.s32.totalorder %v560, 1
      %vm563 = vcmp.eq.s32.totalorder %v561, 1
      %v564 = vsel %vm562, %v558, 0.0
      %v565 = vsel %vm563, %v559, 0.0
      %566 = vrot.lane.b32.xlu0 %v484, 113
      %v567 = vpop.permute.xlu0 %566
      %568 = vrot.lane.b32.xlu0 %v485, 113
      %v569 = vpop.permute.xlu0 %568
      %vm570 = vcmp.lt.s32.totalorder %v335, 113
      %v571 = vsel %vm570, %v567, %v569
      %v572 = vsel %vm570, %v569, %v567
      %vm573 = vcmp.lt.s32.totalorder %v335, 240
      %vm574 = vcmp.lt.s32.totalorder %v336, 240
      %vm575 = vmand %vm573, %vm500
      %vm576 = vmand %vm574, %vm501
      %v577 = vsel %vm575, 1, 0
      %v578 = vsel %vm576, 1, 0
      %vm579 = vcmp.eq.s32.totalorder %v577, 1
      %vm580 = vcmp.eq.s32.totalorder %v578, 1
      %v581 = vsel %vm579, %v571, 0.0
      %v582 = vsel %vm580, %v572, 0.0
      %583 = vrot.lane.b32.xlu0 %v484, 112
      %v584 = vpop.permute.xlu0 %583
      %585 = vrot.lane.b32.xlu0 %v485, 112
      %v586 = vpop.permute.xlu0 %585
      %vm587 = vcmp.lt.s32.totalorder %v335, 112
      %v588 = vsel %vm587, %v584, %v586
      %v589 = vsel %vm587, %v586, %v584
      %v590 = vsel %vm573, 1, 0
      %v591 = vsel %vm574, 1, 0
      %vm592 = vcmp.eq.s32.totalorder %v590, 1
      %vm593 = vcmp.eq.s32.totalorder %v591, 1
      %v594 = vsel %vm592, %v588, 0.0
      %v595 = vsel %vm593, %v589, 0.0
      %596 = vrot.lane.b32.xlu0 %v484, 111
      %v597 = vpop.permute.xlu0 %596
      %598 = vrot.lane.b32.xlu0 %v485, 111
      %v599 = vpop.permute.xlu0 %598
      %vm600 = vcmp.lt.s32.totalorder %v335, 111
      %v601 = vsel %vm600, %v597, %v599
      %v602 = vsel %vm600, %v599, %v597
      %vm603 = vmand %vm573, %vm530
      %vm604 = vmand %vm574, %vm531
      %v605 = vsel %vm603, 1, 0
      %v606 = vsel %vm604, 1, 0
      %vm607 = vcmp.eq.s32.totalorder %v605, 1
      %vm608 = vcmp.eq.s32.totalorder %v606, 1
      %v609 = vsel %vm607, %v601, 0.0
      %v610 = vsel %vm608, %v602, 0.0
      %v611 = vld [vmem:[%s4] sm:$0xff]
      %613 = vset.pattern.permute.xlu0 0
      %614 = vperm.xlu0 %613, %v611
      %v615 = vpop.permute.xlu0 %614
      %vm617 = vcmask 588800
      %v619 = vsel %vm617, %v490, 0
      %621 = vmatprep.subr.mxu0 %v509
      %622 = vmatpush1.msra.mxu0 %v508
      %623 = vmatprep.subr.mxu0 %v522
      %624 = vmatpush1.msra.mxu0 %v521
      %625 = vmatprep.subr.mxu0 %v539
      %626 = vmatpush1.msra.mxu0 %v538
      %627 = vmatprep.subr.mxu0 %v552
      %628 = vmatpush1.msra.mxu0 %v551
      %629 = vmatprep.subr.mxu0 %v485
      %630 = vmatpush1.msra.mxu0 %v484
      %631 = vmatprep.subr.mxu0 %v565
      %632 = vmatpush1.msra.mxu0 %v564
      %633 = vmatprep.subr.mxu0 %v582
      %634 = vmatpush1.msra.mxu0 %v581
      %635 = vmatprep.subr.mxu0 %v595
      %636 = vmatpush1.msra.mxu0 %v594
      %637 = vmatprep.subr.mxu0 %v610
      %638 = vmatpush1.msra.mxu0 %v609
      %639 = vmatprep.subr.mxu0 0.0
      %640 = vmatpush1.msra.mxu0 0.0
      %641 = vmatprep.subr.mxu0 0.0
      %642 = vmatpush1.msra.mxu0 0.0
      %643 = vmatprep.subr.mxu0 0.0
      %644 = vmatpush1.msra.mxu0 0.0
      %645 = vmatprep.subr.mxu0 0.0
      %646 = vmatpush1.msra.mxu0 0.0
      %647 = vmatprep.subr.mxu0 0.0
      %648 = vmatpush1.msra.mxu0 0.0
      %649 = vmatprep.subr.mxu0 0.0
      %650 = vmatpush1.msra.mxu0 0.0
      %651 = vmatprep.subr.mxu0 0.0
      %652 = vmatpush1.msra.mxu0 0.0
      %653 = vmatprep.subr.mxu0 0.0
      %654 = vmatpush1.msra.mxu0 0.0
      %655 = vmatprep.subr.mxu0 0.0
      %656 = vmatpush1.msra.mxu0 0.0
      %657 = vmatprep.subr.mxu0 0.0
      %658 = vmatpush1.msra.mxu0 0.0
      %659 = vmatprep.subr.mxu0 0.0
      %660 = vmatpush1.msra.mxu0 0.0
      %661 = vmatprep.subr.mxu0 0.0
      %662 = vmatpush1.msra.mxu0 0.0
      %663 = vmatprep.subr.mxu0 0.0
      %664 = vmatpush1.msra.mxu0 0.0
      %665 = vmatprep.subr.mxu0 0.0
      %666 = vmatpush1.msra.mxu0 0.0
      %667 = vmatprep.subr.mxu0 0.0
      %668 = vmatpush1.msra.mxu0 0.0
      %669 = vmatprep.subr.mxu0 0.0
      %670 = vmatpush1.msra.mxu0 0.0
      %671 = vmatprep.subr.mxu0 0.0
      %672 = vmatpush1.msra.mxu0 0.0
      %673 = vmatprep.subr.mxu0 0.0
      %674 = vmatpush1.msra.mxu0 0.0
      %675 = vmatprep.subr.mxu0 0.0
      %676 = vmatpush1.msra.mxu0 0.0
      %677 = vmatprep.subr.mxu0 0.0
      %678 = vmatpush1.msra.mxu0 0.0
      %679 = vmatprep.subr.mxu0 0.0
      %680 = vmatpush1.msra.mxu0 0.0
      %681 = vmatprep.subr.mxu0 0.0
      %682 = vmatpush1.msra.mxu0 0.0
      %683 = vmatprep.subr.mxu0 0.0
      %684 = vmatpush1.msra.mxu0 0.0
      %685 = vmatprep.mubr.f32.mxu0 0.0
      %686 = vmatmul.mubr.f32.gmra.mrb[0].mxu0 %v619
      %v687 = vpop.f32.mrb[0].mxu0
      %v688 = vadd.f32 %v615, %v687
      %v689 = vpop.f32.mrb[0].mxu0
      %v690 = vadd.f32 %v615, %v689
      %691 = vdwg.mxu0
      %v692 = vmax.f32 %v688, 0.0
      %v693 = vmax.f32 %v690, 0.0
      %v696 = vrot.slane %v692, 4
      %v697 = vrot.slane %v693, 4
      %700 = vst [vmem:[%s332] sm:$0xf0] %v696
      %701 = vst [vmem:[%s332 + $0x8] sm:$0xf0] %v697
      %702 = vst [vmem:[%s332 + $0x10] sm:$0xf] %v696
      %703 = vst [vmem:[%s332 + $0x18] sm:$0xf] %v697
      %v704 = vld [vmem:[%s5] sm:$0xff]
      %v705 = vld [vmem:[%s5 + $0x8] sm:$0xff]
      %706 = vrot.lane.b32.xlu0 %v486, 34
      %v707 = vpop.permute.xlu0 %706
      %708 = vrot.lane.b32.xlu0 %v487, 34
      %v709 = vpop.permute.xlu0 %708
      %vm710 = vcmp.lt.s32.totalorder %v335, 34
      %v711 = vsel %vm710, %v707, %v709
      %v712 = vsel %vm710, %v709, %v707
      %vm713 = vcmp.ge.s32.totalorder %v335, 32
      %vm714 = vcmp.ge.s32.totalorder %v336, 32
      %vm715 = vcmp.ge.s32.totalorder %v359, 2
      %vm716 = vcmp.ge.s32.totalorder %v360, 2
      %vm717 = vmand %vm713, %vm715
      %vm718 = vmand %vm714, %vm716
      %v719 = vsel %vm717, 1, 0
      %v720 = vsel %vm718, 1, 0
      %vm721 = vcmp.eq.s32.totalorder %v719, 1
      %vm722 = vcmp.eq.s32.totalorder %v720, 1
      %v723 = vsel %vm721, %v712, 0.0
      %v724 = vsel %vm722, %v711, 0.0
      %725 = vrot.lane.b32.xlu0 %v486, 33
      %v726 = vpop.permute.xlu0 %725
      %727 = vrot.lane.b32.xlu0 %v487, 33
      %v728 = vpop.permute.xlu0 %727
      %vm729 = vcmp.lt.s32.totalorder %v335, 33
      %v730 = vsel %vm729, %v726, %v728
      %v731 = vsel %vm729, %v728, %v726
      %vm732 = vmand %vm713, %vm500
      %vm733 = vmand %vm714, %vm501
      %v734 = vsel %vm732, 1, 0
      %v735 = vsel %vm733, 1, 0
      %vm736 = vcmp.eq.s32.totalorder %v734, 1
      %vm737 = vcmp.eq.s32.totalorder %v735, 1
      %v738 = vsel %vm736, %v731, 0.0
      %v739 = vsel %vm737, %v730, 0.0
      %740 = vrot.lane.b32.xlu0 %v486, 32
      %v741 = vpop.permute.xlu0 %740
      %742 = vrot.lane.b32.xlu0 %v487, 32
      %v743 = vpop.permute.xlu0 %742
      %vm744 = vcmp.lt.s32.totalorder %v335, 32
      %v745 = vsel %vm744, %v741, %v743
      %v746 = vsel %vm744, %v743, %v741
      %v747 = vsel %vm713, 1, 0
      %v748 = vsel %vm714, 1, 0
      %vm749 = vcmp.eq.s32.totalorder %v747, 1
      %vm750 = vcmp.eq.s32.totalorder %v748, 1
      %v751 = vsel %vm749, %v746, 0.0
      %v752 = vsel %vm750, %v745, 0.0
      %753 = vrot.lane.b32.xlu0 %v486, 31
      %v754 = vpop.permute.xlu0 %753
      %755 = vrot.lane.b32.xlu0 %v487, 31
      %v756 = vpop.permute.xlu0 %755
      %vm757 = vcmp.lt.s32.totalorder %v335, 31
      %v758 = vsel %vm757, %v754, %v756
      %v759 = vsel %vm757, %v756, %v754
      %vm760 = vmand %vm713, %vm530
      %vm761 = vmand %vm714, %vm531
      %v762 = vsel %vm760, 1, 0
      %v763 = vsel %vm761, 1, 0
      %vm764 = vcmp.eq.s32.totalorder %v762, 1
      %vm765 = vcmp.eq.s32.totalorder %v763, 1
      %v766 = vsel %vm764, %v759, 0.0
      %v767 = vsel %vm765, %v758, 0.0
      %768 = vrot.lane.b32.xlu0 %v486, 30
      %v769 = vpop.permute.xlu0 %768
      %770 = vrot.lane.b32.xlu0 %v487, 30
      %v771 = vpop.permute.xlu0 %770
      %vm772 = vcmp.lt.s32.totalorder %v335, 30
      %v773 = vsel %vm772, %v769, %v771
      %v774 = vsel %vm772, %v771, %v769
      %vm775 = vcmp.lt.s32.totalorder %v359, 14
      %vm776 = vcmp.lt.s32.totalorder %v360, 14
      %vm777 = vmand %vm713, %vm775
      %vm778 = vmand %vm714, %vm776
      %v779 = vsel %vm777, 1, 0
      %v780 = vsel %vm778, 1, 0
      %vm781 = vcmp.eq.s32.totalorder %v779, 1
      %vm782 = vcmp.eq.s32.totalorder %v780, 1
      %v783 = vsel %vm781, %v774, 0.0
      %v784 = vsel %vm782, %v773, 0.0
      %785 = vrot.lane.b32.xlu0 %v486, 18
      %v786 = vpop.permute.xlu0 %785
      %787 = vrot.lane.b32.xlu0 %v487, 18
      %v788 = vpop.permute.xlu0 %787
      %vm789 = vcmp.lt.s32.totalorder %v335, 18
      %v790 = vsel %vm789, %v786, %v788
      %v791 = vsel %vm789, %v788, %v786
      %vm792 = vmand %vm498, %vm715
      %vm793 = vmand %vm499, %vm716
      %v794 = vsel %vm792, 1, 0
      %v795 = vsel %vm793, 1, 0
      %vm796 = vcmp.eq.s32.totalorder %v794, 1
      %vm797 = vcmp.eq.s32.totalorder %v795, 1
      %v798 = vsel %vm796, %v791, 0.0
      %v799 = vsel %vm797, %v790, 0.0
      %800 = vrot.lane.b32.xlu0 %v486, 17
      %v801 = vpop.permute.xlu0 %800
      %802 = vrot.lane.b32.xlu0 %v487, 17
      %v803 = vpop.permute.xlu0 %802
      %v804 = vsel %vm495, %v801, %v803
      %v805 = vsel %vm495, %v803, %v801
      %v806 = vsel %vm506, %v805, 0.0
      %v807 = vsel %vm507, %v804, 0.0
      %808 = vrot.lane.b32.xlu0 %v486, 16
      %v809 = vpop.permute.xlu0 %808
      %810 = vrot.lane.b32.xlu0 %v487, 16
      %v811 = vpop.permute.xlu0 %810
      %v812 = vsel %vm514, %v809, %v811
      %v813 = vsel %vm514, %v811, %v809
      %v814 = vsel %vm519, %v813, 0.0
      %v815 = vsel %vm520, %v812, 0.0
      %816 = vrot.lane.b32.xlu0 %v486, 15
      %v817 = vpop.permute.xlu0 %816
      %818 = vrot.lane.b32.xlu0 %v487, 15
      %v819 = vpop.permute.xlu0 %818
      %v820 = vsel %vm527, %v817, %v819
      %v821 = vsel %vm527, %v819, %v817
      %v822 = vsel %vm536, %v821, 0.0
      %v823 = vsel %vm537, %v820, 0.0
      %824 = vrot.lane.b32.xlu0 %v486, 14
      %v825 = vpop.permute.xlu0 %824
      %826 = vrot.lane.b32.xlu0 %v487, 14
      %v827 = vpop.permute.xlu0 %826
      %vm828 = vcmp.lt.s32.totalorder %v335, 14
      %v829 = vsel %vm828, %v825, %v827
      %v830 = vsel %vm828, %v827, %v825
      %vm831 = vmand %vm498, %vm775
      %vm832 = vmand %vm499, %vm776
      %v833 = vsel %vm831, 1, 0
      %v834 = vsel %vm832, 1, 0
      %vm835 = vcmp.eq.s32.totalorder %v833, 1
      %vm836 = vcmp.eq.s32.totalorder %v834, 1
      %v837 = vsel %vm835, %v830, 0.0
      %v838 = vsel %vm836, %v829, 0.0
      %839 = vrot.lane.b32.xlu0 %v486, 2
      %v840 = vpop.permute.xlu0 %839
      %841 = vrot.lane.b32.xlu0 %v487, 2
      %v842 = vpop.permute.xlu0 %841
      %vm843 = vcmp.lt.s32.totalorder %v335, 2
      %v844 = vsel %vm843, %v840, %v842
      %v845 = vsel %vm843, %v842, %v840
      %v846 = vsel %vm715, 1, 0
      %v847 = vsel %vm716, 1, 0
      %vm848 = vcmp.eq.s32.totalorder %v846, 1
      %vm849 = vcmp.eq.s32.totalorder %v847, 1
      %v850 = vsel %vm848, %v845, 0.0
      %v851 = vsel %vm849, %v844, 0.0
      %852 = vrot.lane.b32.xlu0 %v486, 1
      %v853 = vpop.permute.xlu0 %852
      %854 = vrot.lane.b32.xlu0 %v487, 1
      %v855 = vpop.permute.xlu0 %854
      %v856 = vsel %vm544, %v853, %v855
      %v857 = vsel %vm544, %v855, %v853
      %v858 = vsel %vm549, %v857, 0.0
      %v859 = vsel %vm550, %v856, 0.0
      %860 = vrot.lane.b32.xlu0 %v486, 127
      %v861 = vpop.permute.xlu0 %860
      %862 = vrot.lane.b32.xlu0 %v487, 127
      %v863 = vpop.permute.xlu0 %862
      %v864 = vsel %vm557, %v861, %v863
      %v865 = vsel %vm557, %v863, %v861
      %v866 = vsel %vm562, %v864, 0.0
      %v867 = vsel %vm563, %v865, 0.0
      %868 = vrot.lane.b32.xlu0 %v486, 126
      %v869 = vpop.permute.xlu0 %868
      %870 = vrot.lane.b32.xlu0 %v487, 126
      %v871 = vpop.permute.xlu0 %870
      %vm872 = vcmp.lt.s32.totalorder %v335, 126
      %v873 = vsel %vm872, %v869, %v871
      %v874 = vsel %vm872, %v871, %v869
      %v875 = vsel %vm775, 1, 0
      %v876 = vsel %vm776, 1, 0
      %vm877 = vcmp.eq.s32.totalorder %v875, 1
      %vm878 = vcmp.eq.s32.totalorder %v876, 1
      %v879 = vsel %vm877, %v873, 0.0
      %v880 = vsel %vm878, %v874, 0.0
      %881 = vrot.lane.b32.xlu0 %v486, 114
      %v882 = vpop.permute.xlu0 %881
      %883 = vrot.lane.b32.xlu0 %v487, 114
      %v884 = vpop.permute.xlu0 %883
      %vm885 = vcmp.lt.s32.totalorder %v335, 114
      %v886 = vsel %vm885, %v882, %v884
      %v887 = vsel %vm885, %v884, %v882
      %vm888 = vmand %vm573, %vm715
      %vm889 = vmand %vm574, %vm716
      %v890 = vsel %vm888, 1, 0
      %v891 = vsel %vm889, 1, 0
      %vm892 = vcmp.eq.s32.totalorder %v890, 1
      %vm893 = vcmp.eq.s32.totalorder %v891, 1
      %v894 = vsel %vm892, %v886, 0.0
      %v895 = vsel %vm893, %v887, 0.0
      %896 = vrot.lane.b32.xlu0 %v486, 113
      %v897 = vpop.permute.xlu0 %896
      %898 = vrot.lane.b32.xlu0 %v487, 113
      %v899 = vpop.permute.xlu0 %898
      %v900 = vsel %vm570, %v897, %v899
      %v901 = vsel %vm570, %v899, %v897
      %v902 = vsel %vm579, %v900, 0.0
      %v903 = vsel %vm580, %v901, 0.0
      %904 = vrot.lane.b32.xlu0 %v486, 112
      %v905 = vpop.permute.xlu0 %904
      %906 = vrot.lane.b32.xlu0 %v487, 112
      %v907 = vpop.permute.xlu0 %906
      %v908 = vsel %vm587, %v905, %v907
      %v909 = vsel %vm587, %v907, %v905
      %v910 = vsel %vm592, %v908, 0.0
      %v911 = vsel %vm593, %v909, 0.0
      %912 = vrot.lane.b32.xlu0 %v486, 111
      %v913 = vpop.permute.xlu0 %912
      %914 = vrot.lane.b32.xlu0 %v487, 111
      %v915 = vpop.permute.xlu0 %914
      %v916 = vsel %vm600, %v913, %v915
      %v917 = vsel %vm600, %v915, %v913
      %v918 = vsel %vm607, %v916, 0.0
      %v919 = vsel %vm608, %v917, 0.0
      %920 = vrot.lane.b32.xlu0 %v486, 110
      %v921 = vpop.permute.xlu0 %920
      %922 = vrot.lane.b32.xlu0 %v487, 110
      %v923 = vpop.permute.xlu0 %922
      %vm924 = vcmp.lt.s32.totalorder %v335, 110
      %v925 = vsel %vm924, %v921, %v923
      %v926 = vsel %vm924, %v923, %v921
      %vm927 = vmand %vm573, %vm775
      %vm928 = vmand %vm574, %vm776
      %v929 = vsel %vm927, 1, 0
      %v930 = vsel %vm928, 1, 0
      %vm931 = vcmp.eq.s32.totalorder %v929, 1
      %vm932 = vcmp.eq.s32.totalorder %v930, 1
      %v933 = vsel %vm931, %v925, 0.0
      %v934 = vsel %vm932, %v926, 0.0
      %935 = vrot.lane.b32.xlu0 %v486, 98
      %v936 = vpop.permute.xlu0 %935
      %937 = vrot.lane.b32.xlu0 %v487, 98
      %v938 = vpop.permute.xlu0 %937
      %vm939 = vcmp.lt.s32.totalorder %v335, 98
      %v940 = vsel %vm939, %v936, %v938
      %v941 = vsel %vm939, %v938, %v936
      %vm942 = vcmp.lt.s32.totalorder %v335, 224
      %vm943 = vcmp.lt.s32.totalorder %v336, 224
      %vm944 = vmand %vm942, %vm715
      %vm945 = vmand %vm943, %vm716
      %v946 = vsel %vm944, 1, 0
      %v947 = vsel %vm945, 1, 0
      %vm948 = vcmp.eq.s32.totalorder %v946, 1
      %vm949 = vcmp.eq.s32.totalorder %v947, 1
      %v950 = vsel %vm948, %v940, 0.0
      %v951 = vsel %vm949, %v941, 0.0
      %952 = vrot.lane.b32.xlu0 %v486, 97
      %v953 = vpop.permute.xlu0 %952
      %954 = vrot.lane.b32.xlu0 %v487, 97
      %v955 = vpop.permute.xlu0 %954
      %vm956 = vcmp.lt.s32.totalorder %v335, 97
      %v957 = vsel %vm956, %v953, %v955
      %v958 = vsel %vm956, %v955, %v953
      %vm959 = vmand %vm942, %vm500
      %vm960 = vmand %vm943, %vm501
      %v961 = vsel %vm959, 1, 0
      %v962 = vsel %vm960, 1, 0
      %vm963 = vcmp.eq.s32.totalorder %v961, 1
      %vm964 = vcmp.eq.s32.totalorder %v962, 1
      %v965 = vsel %vm963, %v957, 0.0
      %v966 = vsel %vm964, %v958, 0.0
      %967 = vrot.lane.b32.xlu0 %v486, 96
      %v968 = vpop.permute.xlu0 %967
      %969 = vrot.lane.b32.xlu0 %v487, 96
      %v970 = vpop.permute.xlu0 %969
      %vm971 = vcmp.lt.s32.totalorder %v335, 96
      %v972 = vsel %vm971, %v968, %v970
      %v973 = vsel %vm971, %v970, %v968
      %v974 = vsel %vm942, 1, 0
      %v975 = vsel %vm943, 1, 0
      %vm976 = vcmp.eq.s32.totalorder %v974, 1
      %vm977 = vcmp.eq.s32.totalorder %v975, 1
      %v978 = vsel %vm976, %v972, 0.0
      %v979 = vsel %vm977, %v973, 0.0
      %980 = vrot.lane.b32.xlu0 %v486, 95
      %v981 = vpop.permute.xlu0 %980
      %982 = vrot.lane.b32.xlu0 %v487, 95
      %v983 = vpop.permute.xlu0 %982
      %vm984 = vcmp.lt.s32.totalorder %v335, 95
      %v985 = vsel %vm984, %v981, %v983
      %v986 = vsel %vm984, %v983, %v981
      %vm987 = vmand %vm942, %vm530
      %vm988 = vmand %vm943, %vm531
      %v989 = vsel %vm987, 1, 0
      %v990 = vsel %vm988, 1, 0
      %vm991 = vcmp.eq.s32.totalorder %v989, 1
      %vm992 = vcmp.eq.s32.totalorder %v990, 1
      %v993 = vsel %vm991, %v985, 0.0
      %v994 = vsel %vm992, %v986, 0.0
      %995 = vrot.lane.b32.xlu0 %v486, 94
      %v996 = vpop.permute.xlu0 %995
      %997 = vrot.lane.b32.xlu0 %v487, 94
      %v998 = vpop.permute.xlu0 %997
      %vm999 = vcmp.lt.s32.totalorder %v335, 94
      %v1000 = vsel %vm999, %v996, %v998
      %v1001 = vsel %vm999, %v998, %v996
      %vm1002 = vmand %vm942, %vm775
      %vm1003 = vmand %vm943, %vm776
      %v1004 = vsel %vm1002, 1, 0
      %v1005 = vsel %vm1003, 1, 0
      %vm1006 = vcmp.eq.s32.totalorder %v1004, 1
      %vm1007 = vcmp.eq.s32.totalorder %v1005, 1
      %v1008 = vsel %vm1006, %v1000, 0.0
      %v1009 = vsel %vm1007, %v1001, 0.0
      %v1010 = vld [vmem:[%s6] sm:$0xff]
      %1012 = vset.pattern.permute.xlu0 0
      %1013 = vperm.xlu0 %1012, %v1010
      %v1014 = vpop.permute.xlu0 %1013
      %v1017 = vsel %vm617, %v705, 0
      %1019 = vmatprep.subr.mxu0 %v724
      %1020 = vmatpush1.msra.mxu0 %v723
      %1021 = vmatprep.subr.mxu0 %v739
      %1022 = vmatpush1.msra.mxu0 %v738
      %1023 = vmatprep.subr.mxu0 %v752
      %1024 = vmatpush1.msra.mxu0 %v751
      %1025 = vmatprep.subr.mxu0 %v767
      %1026 = vmatpush1.msra.mxu0 %v766
      %1027 = vmatprep.subr.mxu0 %v784
      %1028 = vmatpush1.msra.mxu0 %v783
      %1029 = vmatprep.subr.mxu0 %v799
      %1030 = vmatpush1.msra.mxu0 %v798
      %1031 = vmatprep.subr.mxu0 %v807
      %1032 = vmatpush1.msra.mxu0 %v806
      %1033 = vmatprep.subr.mxu0 %v815
      %1034 = vmatpush1.msra.mxu0 %v814
      %1035 = vmatprep.subr.mxu0 %v823
      %1036 = vmatpush1.msra.mxu0 %v822
      %1037 = vmatprep.subr.mxu0 %v838
      %1038 = vmatpush1.msra.mxu0 %v837
      %1039 = vmatprep.subr.mxu0 %v851
      %1040 = vmatpush1.msra.mxu0 %v850
      %1041 = vmatprep.subr.mxu0 %v859
      %1042 = vmatpush1.msra.mxu0 %v858
      %1043 = vmatprep.subr.mxu0 %v487
      %1044 = vmatpush1.msra.mxu0 %v486
      %1045 = vmatprep.subr.mxu0 %v867
      %1046 = vmatpush1.msra.mxu0 %v866
      %1047 = vmatprep.subr.mxu0 %v880
      %1048 = vmatpush1.msra.mxu0 %v879
      %1049 = vmatprep.subr.mxu0 %v895
      %1050 = vmatpush1.msra.mxu0 %v894
      %1051 = vmatprep.subr.mxu0 %v903
      %1052 = vmatpush1.msra.mxu0 %v902
      %1053 = vmatprep.subr.mxu0 %v911
      %1054 = vmatpush1.msra.mxu0 %v910
      %1055 = vmatprep.subr.mxu0 %v919
      %1056 = vmatpush1.msra.mxu0 %v918
      %1057 = vmatprep.subr.mxu0 %v934
      %1058 = vmatpush1.msra.mxu0 %v933
      %1059 = vmatprep.subr.mxu0 %v951
      %1060 = vmatpush1.msra.mxu0 %v950
      %1061 = vmatprep.subr.mxu0 %v966
      %1062 = vmatpush1.msra.mxu0 %v965
      %1063 = vmatprep.subr.mxu0 %v979
      %1064 = vmatpush1.msra.mxu0 %v978
      %1065 = vmatprep.subr.mxu0 %v994
      %1066 = vmatpush1.msra.mxu0 %v993
      %1067 = vmatprep.subr.mxu0 %v1009
      %1068 = vmatpush1.msra.mxu0 %v1008
      %1069 = vmatprep.subr.mxu0 0.0
      %1070 = vmatpush1.msra.mxu0 0.0
      %1071 = vmatprep.subr.mxu0 0.0
      %1072 = vmatpush1.msra.mxu0 0.0
      %1073 = vmatprep.subr.mxu0 0.0
      %1074 = vmatpush1.msra.mxu0 0.0
      %1075 = vmatprep.subr.mxu0 0.0
      %1076 = vmatpush1.msra.mxu0 0.0
      %1077 = vmatprep.subr.mxu0 0.0
      %1078 = vmatpush1.msra.mxu0 0.0
      %1079 = vmatprep.subr.mxu0 0.0
      %1080 = vmatpush1.msra.mxu0 0.0
      %1081 = vmatprep.subr.mxu0 0.0
      %1082 = vmatpush1.msra.mxu0 0.0
      %1083 = vmatprep.mubr.f32.mxu0 %v1017
      %1084 = vmatmul.mubr.f32.gmra.mrb[0].mxu0 %v704
      %v1085 = vpop.f32.mrb[0].mxu0
      %v1086 = vadd.f32 %v1014, %v1085
      %v1087 = vpop.f32.mrb[0].mxu0
      %v1088 = vadd.f32 %v1014, %v1087
      %1089 = vdwg.mxu0
      %v1090 = vmax.f32 %v1086, 0.0
      %v1091 = vmax.f32 %v1088, 0.0
      %v1094 = vrot.slane %v1090, 4
      %v1095 = vrot.slane %v1091, 4
      %1098 = vst [vmem:[%s332 + $0x10] sm:$0xf0] %v1094
      %1099 = vst [vmem:[%s332 + $0x18] sm:$0xf0] %v1095
      %1100 = vst [vmem:[%s332 + $0x20] sm:$0xf] %v1094
      %1101 = vst [vmem:[%s332 + $0x28] sm:$0xf] %v1095
      %1103 = vrot.lane.b32.xlu0 %v333, 17
      %v1104 = vpop.permute.xlu0 %1103
      %1105 = vrot.lane.b32.xlu0 %v383, 17
      %v1106 = vpop.permute.xlu0 %1105
      %v1107 = vsel %vm495, %v1104, %v1106
      %v1108 = vsel %vm495, %v1106, %v1104
      %v1111 = vcombine.low %v1108, %v1107
      %v1113 = vmax.f32 %v333, %v1111
      %v1115 = vcombine.high %v1113, %v1113
      %v1117 = vsel %vm506, %v1113, %v333
      %v1118 = vsel %vm507, %v1115, %v383
      %1119 = vrot.lane.b32.xlu0 %v333, 16
      %v1120 = vpop.permute.xlu0 %1119
      %1121 = vrot.lane.b32.xlu0 %v383, 16
      %v1122 = vpop.permute.xlu0 %1121
      %v1123 = vsel %vm514, %v1120, %v1122
      %v1124 = vsel %vm514, %v1122, %v1120
      %v1125 = vmax.f32 %v1117, %v1124
      %v1126 = vmax.f32 %v1118, %v1123
      %v1127 = vsel %vm519, %v1125, %v1117
      %v1128 = vsel %vm520, %v1126, %v1118
      %1129 = vrot.lane.b32.xlu0 %v333, 15
      %v1130 = vpop.permute.xlu0 %1129
      %1131 = vrot.lane.b32.xlu0 %v383, 15
      %v1132 = vpop.permute.xlu0 %1131
      %v1133 = vsel %vm527, %v1130, %v1132
      %v1134 = vsel %vm527, %v1132, %v1130
      %v1135 = vmax.f32 %v1127, %v1134
      %v1136 = vmax.f32 %v1128, %v1133
      %v1137 = vsel %vm536, %v1135, %v1127
      %v1138 = vsel %vm537, %v1136, %v1128
      %1139 = vrot.lane.b32.xlu0 %v333, 1
      %v1140 = vpop.permute.xlu0 %1139
      %1141 = vrot.lane.b32.xlu0 %v383, 1
      %v1142 = vpop.permute.xlu0 %1141
      %v1143 = vsel %vm544, %v1140, %v1142
      %v1144 = vsel %vm544, %v1142, %v1140
      %v1145 = vmax.f32 %v1137, %v1144
      %v1146 = vmax.f32 %v1138, %v1143
      %v1147 = vsel %vm549, %v1145, %v1137
      %v1148 = vsel %vm550, %v1146, %v1138
      %1149 = vrot.lane.b32.xlu0 %v333, 127
      %v1150 = vpop.permute.xlu0 %1149
      %1151 = vrot.lane.b32.xlu0 %v383, 127
      %v1152 = vpop.permute.xlu0 %1151
      %v1153 = vsel %vm557, %v1150, %v1152
      %v1154 = vsel %vm557, %v1152, %v1150
      %v1155 = vmax.f32 %v1147, %v1153
      %v1156 = vmax.f32 %v1148, %v1154
      %v1157 = vsel %vm562, %v1155, %v1147
      %v1158 = vsel %vm563, %v1156, %v1148
      %1159 = vrot.lane.b32.xlu0 %v333, 113
      %v1160 = vpop.permute.xlu0 %1159
      %1161 = vrot.lane.b32.xlu0 %v383, 113
      %v1162 = vpop.permute.xlu0 %1161
      %v1163 = vsel %vm570, %v1160, %v1162
      %v1164 = vsel %vm570, %v1162, %v1160
      %v1165 = vmax.f32 %v1157, %v1163
      %v1166 = vmax.f32 %v1158, %v1164
      %v1167 = vsel %vm579, %v1165, %v1157
      %v1168 = vsel %vm580, %v1166, %v1158
      %1169 = vrot.lane.b32.xlu0 %v333, 112
      %v1170 = vpop.permute.xlu0 %1169
      %1171 = vrot.lane.b32.xlu0 %v383, 112
      %v1172 = vpop.permute.xlu0 %1171
      %v1173 = vsel %vm587, %v1170, %v1172
      %v1174 = vsel %vm587, %v1172, %v1170
      %v1175 = vmax.f32 %v1167, %v1173
      %v1176 = vmax.f32 %v1168, %v1174
      %v1177 = vsel %vm592, %v1175, %v1167
      %v1178 = vsel %vm593, %v1176, %v1168
      %1179 = vrot.lane.b32.xlu0 %v333, 111
      %v1180 = vpop.permute.xlu0 %1179
      %1181 = vrot.lane.b32.xlu0 %v383, 111
      %v1182 = vpop.permute.xlu0 %1181
      %v1183 = vsel %vm600, %v1180, %v1182
      %v1184 = vsel %vm600, %v1182, %v1180
      %v1185 = vmax.f32 %v1177, %v1183
      %v1186 = vmax.f32 %v1178, %v1184
      %v1187 = vsel %vm607, %v1185, %v1177
      %v1188 = vsel %vm608, %v1186, %v1178
      %v1189 = vld [vmem:[%s7] sm:$0xf]
      %v1190 = vld [vmem:[%s8] sm:$0xf]
      %1192 = vset.pattern.permute.xlu0 0
      %1193 = vperm.xlu0 %1192, %v1190
      %v1194 = vpop.permute.xlu0 %1193
      %v1197 = vsel %vm384, %v1189, 0
      %v1200 = vsel %vm394, %v1187, 0
      %v1203 = vsel %vm394, %v1188, 0
      %1205 = vmatprep.subr.mxu0 %v1203
      %1206 = vmatpush1.msra.mxu0 %v1200
      %1207 = vmatprep.subr.mxu0 0.0
      %1208 = vmatpush1.msra.mxu0 0.0
      %1209 = vmatprep.subr.mxu0 0.0
      %1210 = vmatpush1.msra.mxu0 0.0
      %1211 = vmatprep.subr.mxu0 0.0
      %1212 = vmatpush1.msra.mxu0 0.0
      %1213 = vmatprep.subr.mxu0 0.0
      %1214 = vmatpush1.msra.mxu0 0.0
      %1215 = vmatprep.subr.mxu0 0.0
      %1216 = vmatpush1.msra.mxu0 0.0
      %1217 = vmatprep.subr.mxu0 0.0
      %1218 = vmatpush1.msra.mxu0 0.0
      %1219 = vmatprep.subr.mxu0 0.0
      %1220 = vmatpush1.msra.mxu0 0.0
      %1221 = vmatprep.subr.mxu0 0.0
      %1222 = vmatpush1.msra.mxu0 0.0
      %1223 = vmatprep.subr.mxu0 0.0
      %1224 = vmatpush1.msra.mxu0 0.0
      %1225 = vmatprep.subr.mxu0 0.0
      %1226 = vmatpush1.msra.mxu0 0.0
      %1227 = vmatprep.subr.mxu0 0.0
      %1228 = vmatpush1.msra.mxu0 0.0
      %1229 = vmatprep.subr.mxu0 0.0
      %1230 = vmatpush1.msra.mxu0 0.0
      %1231 = vmatprep.subr.mxu0 0.0
      %1232 = vmatpush1.msra.mxu0 0.0
      %1233 = vmatprep.subr.mxu0 0.0
      %1234 = vmatpush1.msra.mxu0 0.0
      %1235 = vmatprep.subr.mxu0 0.0
      %1236 = vmatpush1.msra.mxu0 0.0
      %1237 = vmatprep.subr.mxu0 0.0
      %1238 = vmatpush1.msra.mxu0 0.0
      %1239 = vmatprep.subr.mxu0 0.0
      %1240 = vmatpush1.msra.mxu0 0.0
      %1241 = vmatprep.subr.mxu0 0.0
      %1242 = vmatpush1.msra.mxu0 0.0
      %1243 = vmatprep.subr.mxu0 0.0
      %1244 = vmatpush1.msra.mxu0 0.0
      %1245 = vmatprep.subr.mxu0 0.0
      %1246 = vmatpush1.msra.mxu0 0.0
      %1247 = vmatprep.subr.mxu0 0.0
      %1248 = vmatpush1.msra.mxu0 0.0
      %1249 = vmatprep.subr.mxu0 0.0
      %1250 = vmatpush1.msra.mxu0 0.0
      %1251 = vmatprep.subr.mxu0 0.0
      %1252 = vmatpush1.msra.mxu0 0.0
      %1253 = vmatprep.subr.mxu0 0.0
      %1254 = vmatpush1.msra.mxu0 0.0
      %1255 = vmatprep.subr.mxu0 0.0
      %1256 = vmatpush1.msra.mxu0 0.0
      %1257 = vmatprep.subr.mxu0 0.0
      %1258 = vmatpush1.msra.mxu0 0.0
      %1259 = vmatprep.subr.mxu0 0.0
      %1260 = vmatpush1.msra.mxu0 0.0
      %1261 = vmatprep.subr.mxu0 0.0
      %1262 = vmatpush1.msra.mxu0 0.0
      %1263 = vmatprep.subr.mxu0 0.0
      %1264 = vmatpush1.msra.mxu0 0.0
      %1265 = vmatprep.subr.mxu0 0.0
      %1266 = vmatpush1.msra.mxu0 0.0
      %1267 = vmatprep.subr.mxu0 0.0
      %1268 = vmatpush1.msra.mxu0 0.0
      %1269 = vmatprep.mubr.f32.mxu0 0.0
      %1270 = vmatmul.mubr.f32.gmra.mrb[0].mxu0 %v1197
      %v1271 = vpop.f32.mrb[0].mxu0
      %v1272 = vadd.f32 %v1194, %v1271
      %v1273 = vpop.f32.mrb[0].mxu0
      %v1274 = vadd.f32 %v1194, %v1273
      %1275 = vdwg.mxu0
      %v1276 = vmax.f32 %v1272, 0.0
      %v1277 = vmax.f32 %v1274, 0.0
      %v1280 = vrot.slane %v1276, 4
      %v1281 = vrot.slane %v1277, 4
      %1284 = vst [vmem:[%s332 + $0x20] sm:$0xf0] %v1280
      %1285 = vst [vmem:[%s332 + $0x28] sm:$0xf0] %v1281
      %p1286 = scmp.lt.s32.totalorder %s20, 1
      %s1287 = scalar_select %p1286, %s20, 1
      %s1288 = smul.addr %s1287, 6
      %s1289 = smul.addr %s1288, 8
      %s1290 = scalar_lea.vmem %s9, %s1289
      // Predicated region
      $region57: #{forward.1} parent=55 // pred_check
        %p1291 = pneg %p232
      $region58: #{forward.1} parent=55 // pred_check_branch
        %1293 = sbr.rel (%p1291) target = $region60
      $region59: #{forward.1} parent=55 // pred_region
        _
      $region60: #{forward.1} parent=55 // pred_fallthru
        _
    $region56: #{forward.1} parent=5 // pred_fallthru
      _
    %p1294 = scmp.le.s32.totalorder 2, %s15
    // Predicated region
    $region61: #{forward.1} parent=5 // pred_check
      %p1295 = pneg %p1294
    $region62: #{forward.1} parent=5 // pred_check_branch
      %1297 = sbr.rel (%p1295) target = $region64
    $region63: #{forward.1} parent=5 // pred_region
      %s1298 = ssub.s32 %s15, 2
      // Predicated region
      $region65: #{forward.1} parent=63 // pred_check
        %p1299 = pneg %p238
      $region66: #{forward.1} parent=63 // pred_check_branch
        %1301 = sbr.rel (%p1299) target = $region68
      $region67: #{forward.1} parent=63 // pred_region
        %p1302 = scmp.lt.s32.totalorder %s21, 1
        %s1303 = scalar_select %p1302, %s21, 1
        %s1304 = smul.addr %s1303, 6
        %s1305 = smul.addr %s1304, 8
        %s1306 = scalar_lea.vmem %s9, %s1305
      $region68: #{forward.1} parent=63 // pred_fallthru
        _
    $region64: #{forward.1} parent=5 // pred_fallthru
      _
  $region6: #{forward.1} parent=0 // loop_footer
    %s19 = sadd.s32 1, %s15
  $region7: #{forward.1} parent=0 // loop_footer_branch
    %14 = sbr.rel target = $region3
  $region8: #{forward.1} parent=0 // loop_exit
    _

</llo_original>
